<compile_context>
chip_gen: v6e
topology: v6e:2x2x1
jax: 0.10.0
libtpu: 0.0.40
codegen_flags: <defaults>
</compile_context>

<pallas_src>
import functools
import math

import jax
import jax.numpy as jnp
from jax.experimental import pallas as pl
from jax.experimental.pallas import tpu as pltpu

EPS = 1e-12  # ESPnet-style LayerNorm eps


# --------------------------------------------------------------------------- #
# helpers
# --------------------------------------------------------------------------- #
def _layer_norm(x, gamma, beta):
    mean = jnp.mean(x, axis=-1, keepdims=True)
    var = jnp.mean((x - mean) ** 2, axis=-1, keepdims=True)
    return (x - mean) * jax.lax.rsqrt(var + EPS) * gamma + beta


def _dot(a, b):
    # plain 2-D matmul, f32 accumulation on the MXU
    return jax.lax.dot_general(
        a, b, (((1,), (0,)), ((), ())), preferred_element_type=jnp.float32
    )


def _round_up(x, m):
    return (x + m - 1) // m * m


def _device_kind():
    try:
        return jax.devices()[0].device_kind.lower()
    except Exception:  # pragma: no cover
        return ""


def _const_spec(p):
    # constant index_map -> block DMA'd once, stays resident in VMEM
    return pl.BlockSpec(p.shape, lambda *args, _nd=p.ndim: (0,) * _nd)


# --------------------------------------------------------------------------- #
# kernel 1: LayerNorm1 + fused Q/K/V projection, head-major bf16 output
# --------------------------------------------------------------------------- #
def qkv_projection_kernel(x_ref, g_ref, b_ref, wqkv_ref, bqkv_ref,
                          q_ref, k_ref, v_ref, *, n_head):
    x = x_ref[0]                                               # (blk_t, D) f32
    tt, d = x.shape
    dh = d // n_head

    xn = _layer_norm(x, g_ref[...], b_ref[...])
    qkv = _dot(xn.astype(jnp.bfloat16), wqkv_ref[...]) + bqkv_ref[...]  # (blk_t, 3D) f32
    qkv = qkv.astype(jnp.bfloat16)

    def to_heads(m):                                           # (blk_t, D) -> (H, blk_t, dh)
        return pltpu.einshape("thd->htd", m.reshape(tt, n_head, dh))

    q_ref[0] = to_heads(qkv[:, :d])          # already scaled by 1/sqrt(dh) via wq/bq
    k_ref[0] = to_heads(qkv[:, d:2 * d])
    v_ref[0] = to_heads(qkv[:, 2 * d:])


# --------------------------------------------------------------------------- #
# kernel 2: flash attention (online softmax over kv blocks) + out-proj + residual
# --------------------------------------------------------------------------- #
def flash_attention_kernel(q_ref, k_ref, v_ref, xres_ref, wo_ref, bo_ref,
                           o_ref, m_scr, l_scr, acc_scr,
                           *, seq_len, padded_len, block_k, use_bf16_exp):
    ki = pl.program_id(2)
    nk = pl.num_programs(2)

    @pl.when(ki == 0)
    def _init():
        m_scr[...] = jnp.full(m_scr.shape, -jnp.inf, m_scr.dtype)
        l_scr[...] = jnp.zeros(l_scr.shape, l_scr.dtype)
        acc_scr[...] = jnp.zeros(acc_scr.shape, acc_scr.dtype)

    q = q_ref[0]                                               # (H, blk_q, dh) bf16
    k = k_ref[0]                                               # (H, blk_k, dh) bf16
    v = v_ref[0]                                               # (H, blk_k, dh) bf16

    s = jnp.einsum("hqd,hkd->hqk", q, k,
                   preferred_element_type=jnp.float32)         # (H, blk_q, blk_k) f32

    if seq_len != padded_len:
        # mask padded kv columns (sequence was zero-padded to a block multiple)
        col = ki * block_k + jax.lax.broadcasted_iota(
            jnp.int32, (1, 1, s.shape[-1]), 2)
        s = jnp.where(col < seq_len, s, -1e30)

    m_prev = m_scr[...]
    m_new = jnp.maximum(m_prev, jnp.max(s, axis=-1, keepdims=True))
    alpha = jnp.exp(m_prev - m_new)                            # f32
    sm = s - m_new
    if use_bf16_exp:
        # bf16 exp: halves vregs through the single EUP slot (v6e/v7x).
        p_mm = jnp.exp(sm.astype(jnp.bfloat16))
        p_sum = jnp.sum(p_mm.astype(jnp.float32), axis=-1, keepdims=True)
    else:
        p = jnp.exp(sm)
        p_sum = jnp.sum(p, axis=-1, keepdims=True)
        p_mm = p.astype(jnp.bfloat16)

    l_scr[...] = alpha * l_scr[...] + p_sum
    acc_scr[...] = alpha * acc_scr[...] + jnp.einsum(
        "hqk,hkd->hqd", p_mm, v, preferred_element_type=jnp.float32)
    m_scr[...] = m_new

    @pl.when(ki == nk - 1)
    def _finalize():
        # exact reciprocal here: runs once per q-block, negligible cost.
        ctx = acc_scr[...] / l_scr[...]                        # (H, blk_q, dh) f32
        h, tq, dh = ctx.shape
        ctx = pltpu.einshape("hqd->qhd", ctx.astype(jnp.bfloat16)).reshape(tq, h * dh)
        attn = _dot(ctx, wo_ref[...]) + bo_ref[...]            # (blk_q, D) f32
        o_ref[0] = (xres_ref[0] + attn).astype(o_ref.dtype)    # residual 1


# --------------------------------------------------------------------------- #
# kernel 3: position-wise FFN + residual
# --------------------------------------------------------------------------- #
def ffn_kernel(x_ref, g_ref, b_ref, w1_ref, b1_ref, w2_ref, b2_ref, o_ref):
    x = x_ref[0]                                               # (blk_t, D) f32
    xn = _layer_norm(x, g_ref[...], b_ref[...])
    hid = _dot(xn.astype(jnp.bfloat16), w1_ref[...]) + b1_ref[...]
    hid = jnp.maximum(hid, 0.0)                                # ReLU
    ff = _dot(hid.astype(jnp.bfloat16), w2_ref[...]) + b2_ref[...]
    o_ref[0] = (x + ff).astype(o_ref.dtype)                    # residual 2


# --------------------------------------------------------------------------- #
# wrapper
# --------------------------------------------------------------------------- #
def encoder_layer(x, params, *, n_head, block_q=None, block_k=None):
    """x: (B, T, D) float32. Returns (B, T, D)."""
    B, T, D = x.shape
    assert D % n_head == 0, "model size must be divisible by n_head"
    dh = D // n_head
    bf16 = jnp.bfloat16

    kind = _device_kind()
    use_bf16_exp = ("v6" in kind) or ("v7" in kind) or ("7x" in kind)
    vmem_limit = (96 * 1024 * 1024
                  if any(v in kind for v in ("v3", "v4", "v5", "v6"))
                  else 48 * 1024 * 1024)          # v7x: 64 MiB/TC -> keep headroom

    if block_q is None:
        block_q = 256
    if block_k is None:
        block_k = 512 if any(v in kind for v in ("v5", "v6")) else 256

    # block sizes: multiples of 8, capped by (rounded-up) sequence length
    blk_q = _round_up(min(block_q, _round_up(T, 8)), 8)
    blk_k = _round_up(min(block_k, _round_up(T, 8)), 8)
    lcm = blk_q * blk_k // math.gcd(blk_q, blk_k)
    Tp = _round_up(T, lcm)                        # pad T to a block multiple

    x_p = x if Tp == T else jnp.pad(x, ((0, 0), (0, Tp - T), (0, 0)))

    # fold 1/sqrt(dh) into the query projection; fuse Q/K/V into one (D, 3D) matmul
    scale = 1.0 / math.sqrt(dh)
    wqkv = jnp.concatenate(
        [params["wq"] * scale, params["wk"], params["wv"]], axis=1).astype(bf16)
    bqkv = jnp.concatenate(
        [params["bq"] * scale, params["bk"], params["bv"]], axis=1).astype(jnp.float32)
    wo = params["wo"].astype(bf16)
    w1 = params["w1"].astype(bf16)
    w2 = params["w2"].astype(bf16)

    n_qblk = Tp // blk_q
    n_kblk = Tp // blk_k

    # ---- 1) LN1 + Q/K/V projection, head-major bf16 (hoisted out of flash) ----
    q_hm, k_hm, v_hm = pl.pallas_call(
        functools.partial(qkv_projection_kernel, n_head=n_head),
        out_shape=(
            jax.ShapeDtypeStruct((B, n_head, Tp, dh), bf16),
            jax.ShapeDtypeStruct((B, n_head, Tp, dh), bf16),
            jax.ShapeDtypeStruct((B, n_head, Tp, dh), bf16),
        ),
        grid_spec=pltpu.PrefetchScalarGridSpec(
            num_scalar_prefetch=0,
            grid=(B, n_kblk),
            in_specs=[
                pl.BlockSpec((1, blk_k, D), lambda b, ti: (b, ti, 0)),
                _const_spec(params["ln1_g"]),
                _const_spec(params["ln1_b"]),
                _const_spec(wqkv),
                _const_spec(bqkv),
            ],
            out_specs=[
                pl.BlockSpec((1, n_head, blk_k, dh), lambda b, ti: (b, 0, ti, 0)),
                pl.BlockSpec((1, n_head, blk_k, dh), lambda b, ti: (b, 0, ti, 0)),
                pl.BlockSpec((1, n_head, blk_k, dh), lambda b, ti: (b, 0, ti, 0)),
            ],
        ),
        compiler_params=pltpu.CompilerParams(
            dimension_semantics=("parallel", "parallel"),
            vmem_limit_bytes=vmem_limit),
    )(x_p, params["ln1_g"], params["ln1_b"], wqkv, bqkv)

    # ---- 2) flash attention + output projection + residual ----
    flash = functools.partial(
        flash_attention_kernel,
        seq_len=T, padded_len=Tp, block_k=blk_k, use_bf16_exp=use_bf16_exp)
    x1 = pl.pallas_call(
        flash,
        out_shape=jax.ShapeDtypeStruct((B, Tp, D), jnp.float32),
        grid_spec=pltpu.PrefetchScalarGridSpec(
            num_scalar_prefetch=0,
            grid=(B, n_qblk, n_kblk),
            in_specs=[
                pl.BlockSpec((1, n_head, blk_q, dh), lambda b, qi, ki: (b, 0, qi, 0)),
                pl.BlockSpec((1, n_head, blk_k, dh), lambda b, qi, ki: (b, 0, ki, 0)),
                pl.BlockSpec((1, n_head, blk_k, dh), lambda b, qi, ki: (b, 0, ki, 0)),
                pl.BlockSpec((1, blk_q, D), lambda b, qi, ki: (b, qi, 0)),
                _const_spec(wo),
                _const_spec(params["bo"]),
            ],
            out_specs=pl.BlockSpec((1, blk_q, D), lambda b, qi, ki: (b, qi, 0)),
            scratch_shapes=[
                # trailing-1 scratch keeps the broadcast layout natural (no per-step
                # lane<->sublane transposes); the lane padding is a few MiB at most.
                pltpu.VMEM((n_head, blk_q, 1), jnp.float32),   # running max
                pltpu.VMEM((n_head, blk_q, 1), jnp.float32),   # running denom
                pltpu.VMEM((n_head, blk_q, dh), jnp.float32),  # context accum
            ],
        ),
        compiler_params=pltpu.CompilerParams(
            dimension_semantics=("parallel", "parallel", "arbitrary"),
            vmem_limit_bytes=vmem_limit),
    )(q_hm, k_hm, v_hm, x_p, wo, params["bo"])

    # ---- 3) FFN sublayer (separate call: w1/w2 never resident during attention) ----
    y = pl.pallas_call(
        ffn_kernel,
        out_shape=jax.ShapeDtypeStruct((B, Tp, D), x.dtype),
        grid_spec=pltpu.PrefetchScalarGridSpec(
            num_scalar_prefetch=0,
            grid=(B, n_qblk),
            in_specs=[
                pl.BlockSpec((1, blk_q, D), lambda b, ti: (b, ti, 0)),
                _const_spec(params["ln2_g"]),
                _const_spec(params["ln2_b"]),
                _const_spec(w1),
                _const_spec(params["b1"]),
                _const_spec(w2),
                _const_spec(params["b2"]),
            ],
            out_specs=pl.BlockSpec((1, blk_q, D), lambda b, ti: (b, ti, 0)),
        ),
        compiler_params=pltpu.CompilerParams(
            dimension_semantics=("parallel", "parallel"),
            vmem_limit_bytes=vmem_limit),
    )(x1, params["ln2_g"], params["ln2_b"], w1, params["b1"], w2, params["b2"])

    return y[:, :T, :] if Tp != T else y


# --------------------------------------------------------------------------- #
# params / reference / demo
# --------------------------------------------------------------------------- #
def make_params(key, size, ffn_dim):
    ks = jax.random.split(key, 12)
    s = 0.1
    return {
        "ln1_g": jnp.ones((1, size), jnp.float32),
        "ln1_b": jnp.zeros((1, size), jnp.float32),
        "wq": s * jax.random.normal(ks[0], (size, size), jnp.float32),
        "bq": s * jax.random.normal(ks[1], (1, size), jnp.float32),
        "wk": s * jax.random.normal(ks[2], (size, size), jnp.float32),
        "bk": s * jax.random.normal(ks[3], (1, size), jnp.float32),
        "wv": s * jax.random.normal(ks[4], (size, size), jnp.float32),
        "bv": s * jax.random.normal(ks[5], (1, size), jnp.float32),
        "wo": s * jax.random.normal(ks[6], (size, size), jnp.float32),
        "bo": s * jax.random.normal(ks[7], (1, size), jnp.float32),
        "ln2_g": jnp.ones((1, size), jnp.float32),
        "ln2_b": jnp.zeros((1, size), jnp.float32),
        "w1": s * jax.random.normal(ks[8], (size, ffn_dim), jnp.float32),
        "b1": s * jax.random.normal(ks[9], (1, ffn_dim), jnp.float32),
        "w2": s * jax.random.normal(ks[10], (ffn_dim, size), jnp.float32),
        "b2": s * jax.random.normal(ks[11], (1, size), jnp.float32),
    }


def reference(x, params, n_head):
    """Pure-JAX f32 reference of the EncoderLayer forward (eval mode)."""
    B, T, D = x.shape
    dh = D // n_head

    def ln(v, g, b):
        mu = jnp.mean(v, axis=-1, keepdims=True)
        var = jnp.mean((v - mu) ** 2, axis=-1, keepdims=True)
        return (v - mu) * jax.lax.rsqrt(var + EPS) * g + b

    xn = ln(x, params["ln1_g"], params["ln1_b"])
    q = (xn @ params["wq"] + params["bq"]).reshape(B, T, n_head, dh).transpose(0, 2, 1, 3)
    k = (xn @ params["wk"] + params["bk"]).reshape(B, T, n_head, dh).transpose(0, 2, 1, 3)
    v = (xn @ params["wv"] + params["bv"]).reshape(B, T, n_head, dh).transpose(0, 2, 1, 3)
    s = jnp.einsum("bhqd,bhkd->bhqk", q, k) / jnp.sqrt(jnp.float32(dh))
    p = jax.nn.softmax(s, axis=-1)
    ctx = jnp.einsum("bhqk,bhkd->bhqd", p, v).transpose(0, 2, 1, 3).reshape(B, T, D)
    x1 = x + ctx @ params["wo"] + params["bo"]
    xn2 = ln(x1, params["ln2_g"], params["ln2_b"])
    ff = jnp.maximum(xn2 @ params["w1"] + params["b1"], 0.0) @ params["w2"] + params["b2"]
    return x1 + ff


if __name__ == "__main__":
    # Small but multi-block shapes: T=80 with 32-sized blocks -> padded T=96,
    # 3 q-blocks x 3 kv-blocks, exercising online softmax, kv-padding mask,
    # and the three-kernel pipeline.
    B, T, D = 2, 80, 64       # batch, sequence length, model size
    H, F = 4, 128             # heads, FFN hidden dim

    key = jax.random.PRNGKey(0)
    kx, kp = jax.random.split(key)
    x = jax.random.normal(kx, (B, T, D), jnp.float32)
    params = make_params(kp, D, F)

    out = encoder_layer(x, params, n_head=H, block_q=32, block_k=32)
    out = jax.block_until_ready(out)

    assert out.shape == (B, T, D) and out.dtype == jnp.float32
    assert bool(jnp.all(jnp.isfinite(out)))

    ref = reference(x, params, H)
    err = float(jnp.max(jnp.abs(out - ref)) / (jnp.max(jnp.abs(ref)) + 1e-6))
    assert err < 5e-2, f"mismatch vs reference: normalized max err = {err}"

    print("KERNEL_OK")
</pallas_src>

<mosaic_0001>
module attributes {stable_mosaic.version = 11 : i64} {
  func.func @qkv_projection_kernel(%arg0: i32, %arg1: i32, %arg2: memref<1x32x64xf32, #tpu.memory_space<vmem>>, %arg3: memref<1x64xf32, #tpu.memory_space<vmem>>, %arg4: memref<1x64xf32, #tpu.memory_space<vmem>>, %arg5: memref<64x192xbf16, #tpu.memory_space<vmem>>, %arg6: memref<1x192xf32, #tpu.memory_space<vmem>>, %arg7: memref<1x4x32x16xbf16, #tpu.memory_space<vmem>>, %arg8: memref<1x4x32x16xbf16, #tpu.memory_space<vmem>>, %arg9: memref<1x4x32x16xbf16, #tpu.memory_space<vmem>>) attributes {dimension_semantics = [#tpu.dimension_semantics<parallel>, #tpu.dimension_semantics<parallel>], iteration_bounds = array<i64: 2, 3>, scalar_prefetch = 0 : i64, scratch_operands = 0 : i64, tpu.core_type = #tpu.core_type<tc>, window_params = [{transform_indices = @transform_0, window_bounds = array<i64: 1, 32, 64>}, {pipeline_mode = #tpu.pipeline_mode<synchronous>, transform_indices = @transform_1, window_bounds = array<i64: 1, 64>}, {pipeline_mode = #tpu.pipeline_mode<synchronous>, transform_indices = @transform_2, window_bounds = array<i64: 1, 64>}, {pipeline_mode = #tpu.pipeline_mode<synchronous>, transform_indices = @transform_3, window_bounds = array<i64: 64, 192>}, {pipeline_mode = #tpu.pipeline_mode<synchronous>, transform_indices = @transform_4, window_bounds = array<i64: 1, 192>}, {transform_indices = @transform_5, window_bounds = array<i64: 1, 4, 32, 16>}, {transform_indices = @transform_6, window_bounds = array<i64: 1, 4, 32, 16>}, {transform_indices = @transform_7, window_bounds = array<i64: 1, 4, 32, 16>}]} {
    %c0 = arith.constant 0 : index
    %c0_0 = arith.constant 0 : index
    %c0_1 = arith.constant 0 : index
    %0 = vector.load %arg2[%c0, %c0_0, %c0_1] : memref<1x32x64xf32, #tpu.memory_space<vmem>>, vector<1x32x64xf32>
    %1 = vector.shape_cast %0 : vector<1x32x64xf32> to vector<32x64xf32>
    %c0_2 = arith.constant 0 : index
    %c0_3 = arith.constant 0 : index
    %2 = vector.load %arg3[%c0_2, %c0_3] : memref<1x64xf32, #tpu.memory_space<vmem>>, vector<1x64xf32>
    %c0_4 = arith.constant 0 : index
    %c0_5 = arith.constant 0 : index
    %3 = vector.load %arg4[%c0_4, %c0_5] : memref<1x64xf32, #tpu.memory_space<vmem>>, vector<1x64xf32>
    %cst = arith.constant dense<0.000000e+00> : vector<32xf32>
    %4 = vector.multi_reduction <add>, %1, %cst [1] : vector<32x64xf32> to vector<32xf32>
    %5 = vector.shape_cast %4 : vector<32xf32> to vector<32x1xf32>
    %cst_6 = arith.constant 6.400000e+01 : f32
    %6 = vector.broadcast %cst_6 : f32 to vector<32x1xf32>
    %7 = arith.divf %5, %6 : vector<32x1xf32>
    %8 = vector.broadcast %7 : vector<32x1xf32> to vector<32x64xf32>
    %9 = arith.subf %1, %8 : vector<32x64xf32>
    %10 = arith.mulf %9, %9 : vector<32x64xf32>
    %cst_7 = arith.constant dense<0.000000e+00> : vector<32xf32>
    %11 = vector.multi_reduction <add>, %10, %cst_7 [1] : vector<32x64xf32> to vector<32xf32>
    %12 = vector.shape_cast %11 : vector<32xf32> to vector<32x1xf32>
    %cst_8 = arith.constant 6.400000e+01 : f32
    %13 = vector.broadcast %cst_8 : f32 to vector<32x1xf32>
    %14 = arith.divf %12, %13 : vector<32x1xf32>
    %15 = vector.broadcast %7 : vector<32x1xf32> to vector<32x64xf32>
    %16 = arith.subf %1, %15 : vector<32x64xf32>
    %cst_9 = arith.constant 9.99999996E-13 : f32
    %17 = vector.broadcast %cst_9 : f32 to vector<32x1xf32>
    %18 = arith.addf %14, %17 : vector<32x1xf32>
    %19 = math.rsqrt %18 : vector<32x1xf32>
    %20 = vector.broadcast %19 : vector<32x1xf32> to vector<32x64xf32>
    %21 = arith.mulf %16, %20 : vector<32x64xf32>
    %22 = vector.broadcast %2 : vector<1x64xf32> to vector<32x64xf32>
    %23 = arith.mulf %21, %22 : vector<32x64xf32>
    %24 = vector.broadcast %3 : vector<1x64xf32> to vector<32x64xf32>
    %25 = arith.addf %23, %24 : vector<32x64xf32>
    %26 = arith.truncf %25 : vector<32x64xf32> to vector<32x64xbf16>
    %c0_10 = arith.constant 0 : index
    %c0_11 = arith.constant 0 : index
    %27 = vector.load %arg5[%c0_10, %c0_11] : memref<64x192xbf16, #tpu.memory_space<vmem>>, vector<64x192xbf16>
    %cst_12 = arith.constant dense<0.000000e+00> : vector<32x192xf32>
    %28 = tpu.matmul %26, %27, %cst_12 {dimension_numbers = #tpu.dot_dimension_numbers<[1], [0], [0], [1], [0, 0, 1, 1], [], []>} : vector<32x64xbf16>, vector<64x192xbf16>, vector<32x192xf32> -> vector<32x192xf32>
    %c0_13 = arith.constant 0 : index
    %c0_14 = arith.constant 0 : index
    %29 = vector.load %arg6[%c0_13, %c0_14] : memref<1x192xf32, #tpu.memory_space<vmem>>, vector<1x192xf32>
    %30 = vector.broadcast %29 : vector<1x192xf32> to vector<32x192xf32>
    %31 = arith.addf %28, %30 : vector<32x192xf32>
    %32 = arith.truncf %31 : vector<32x192xf32> to vector<32x192xbf16>
    %33 = vector.extract_strided_slice %32 {offsets = [0, 0], sizes = [32, 64], strides = [1, 1]} : vector<32x192xbf16> to vector<32x64xbf16>
    %34 = vector.shape_cast %33 : vector<32x64xbf16> to vector<32x4x16xbf16>
    %35 = tpu.transpose %34, [1, 0, 2] : vector<32x4x16xbf16> -> vector<4x32x16xbf16>
    %c0_15 = arith.constant 0 : index
    %c0_16 = arith.constant 0 : index
    %c0_17 = arith.constant 0 : index
    %c0_18 = arith.constant 0 : index
    %36 = vector.load %arg7[%c0_15, %c0_16, %c0_17, %c0_18] : memref<1x4x32x16xbf16, #tpu.memory_space<vmem>>, vector<1x4x32x16xbf16>
    %37 = vector.shape_cast %36 : vector<1x4x32x16xbf16> to vector<4x32x16xbf16>
    %38 = vector.shape_cast %35 : vector<4x32x16xbf16> to vector<1x4x32x16xbf16>
    tpu.vector_store %arg7[%c0_15, %c0_16, %c0_17, %c0_18], %38 {strides = array<i32>} : memref<1x4x32x16xbf16, #tpu.memory_space<vmem>>, vector<1x4x32x16xbf16>,
    %39 = vector.extract_strided_slice %32 {offsets = [0, 64], sizes = [32, 64], strides = [1, 1]} : vector<32x192xbf16> to vector<32x64xbf16>
    %40 = vector.shape_cast %39 : vector<32x64xbf16> to vector<32x4x16xbf16>
    %41 = tpu.transpose %40, [1, 0, 2] : vector<32x4x16xbf16> -> vector<4x32x16xbf16>
    %c0_19 = arith.constant 0 : index
    %c0_20 = arith.constant 0 : index
    %c0_21 = arith.constant 0 : index
    %c0_22 = arith.constant 0 : index
    %42 = vector.load %arg8[%c0_19, %c0_20, %c0_21, %c0_22] : memref<1x4x32x16xbf16, #tpu.memory_space<vmem>>, vector<1x4x32x16xbf16>
    %43 = vector.shape_cast %42 : vector<1x4x32x16xbf16> to vector<4x32x16xbf16>
    %44 = vector.shape_cast %41 : vector<4x32x16xbf16> to vector<1x4x32x16xbf16>
    tpu.vector_store %arg8[%c0_19, %c0_20, %c0_21, %c0_22], %44 {strides = array<i32>} : memref<1x4x32x16xbf16, #tpu.memory_space<vmem>>, vector<1x4x32x16xbf16>,
    %45 = vector.extract_strided_slice %32 {offsets = [0, 128], sizes = [32, 64], strides = [1, 1]} : vector<32x192xbf16> to vector<32x64xbf16>
    %46 = vector.shape_cast %45 : vector<32x64xbf16> to vector<32x4x16xbf16>
    %47 = tpu.transpose %46, [1, 0, 2] : vector<32x4x16xbf16> -> vector<4x32x16xbf16>
    %c0_23 = arith.constant 0 : index
    %c0_24 = arith.constant 0 : index
    %c0_25 = arith.constant 0 : index
    %c0_26 = arith.constant 0 : index
    %48 = vector.load %arg9[%c0_23, %c0_24, %c0_25, %c0_26] : memref<1x4x32x16xbf16, #tpu.memory_space<vmem>>, vector<1x4x32x16xbf16>
    %49 = vector.shape_cast %48 : vector<1x4x32x16xbf16> to vector<4x32x16xbf16>
    %50 = vector.shape_cast %47 : vector<4x32x16xbf16> to vector<1x4x32x16xbf16>
    tpu.vector_store %arg9[%c0_23, %c0_24, %c0_25, %c0_26], %50 {strides = array<i32>} : memref<1x4x32x16xbf16, #tpu.memory_space<vmem>>, vector<1x4x32x16xbf16>,
    return
  }
  func.func @transform_0(%arg0: i32, %arg1: i32) -> (i32, i32, i32) {
    %c0_i32 = arith.constant 0 : i32
    %c0_i32_0 = arith.constant 0 : i32
    return %arg0, %arg1, %c0_i32 : i32, i32, i32
  }
  func.func @transform_1(%arg0: i32, %arg1: i32) -> (i32, i32) {
    %c0_i32 = arith.constant 0 : i32
    %c0_i32_0 = arith.constant 0 : i32
    %c0_i32_1 = arith.constant 0 : i32
    return %c0_i32, %c0_i32_0 : i32, i32
  }
  func.func @transform_2(%arg0: i32, %arg1: i32) -> (i32, i32) {
    %c0_i32 = arith.constant 0 : i32
    %c0_i32_0 = arith.constant 0 : i32
    %c0_i32_1 = arith.constant 0 : i32
    return %c0_i32, %c0_i32_0 : i32, i32
  }
  func.func @transform_3(%arg0: i32, %arg1: i32) -> (i32, i32) {
    %c0_i32 = arith.constant 0 : i32
    %c0_i32_0 = arith.constant 0 : i32
    %c0_i32_1 = arith.constant 0 : i32
    return %c0_i32, %c0_i32_0 : i32, i32
  }
  func.func @transform_4(%arg0: i32, %arg1: i32) -> (i32, i32) {
    %c0_i32 = arith.constant 0 : i32
    %c0_i32_0 = arith.constant 0 : i32
    %c0_i32_1 = arith.constant 0 : i32
    return %c0_i32, %c0_i32_0 : i32, i32
  }
  func.func @transform_5(%arg0: i32, %arg1: i32) -> (i32, i32, i32, i32) {
    %c0_i32 = arith.constant 0 : i32
    %c0_i32_0 = arith.constant 0 : i32
    %c0_i32_1 = arith.constant 0 : i32
    return %arg0, %c0_i32, %arg1, %c0_i32_0 : i32, i32, i32, i32
  }
  func.func @transform_6(%arg0: i32, %arg1: i32) -> (i32, i32, i32, i32) {
    %c0_i32 = arith.constant 0 : i32
    %c0_i32_0 = arith.constant 0 : i32
    %c0_i32_1 = arith.constant 0 : i32
    return %arg0, %c0_i32, %arg1, %c0_i32_0 : i32, i32, i32, i32
  }
  func.func @transform_7(%arg0: i32, %arg1: i32) -> (i32, i32, i32, i32) {
    %c0_i32 = arith.constant 0 : i32
    %c0_i32_0 = arith.constant 0 : i32
    %c0_i32_1 = arith.constant 0 : i32
    return %arg0, %c0_i32, %arg1, %c0_i32_0 : i32, i32, i32, i32
  }
}

</mosaic_0001>

<llo_original>
// kernel: tpu_custom_call.1
$region0: #{tpu_custom_call.1}
  #allocation0 [shape = 'u32[]', space=smem, size = 0x4, offset = 0x4, fixed_abs, tag = 'smem constant byte address 0x4 - core index']
  #allocation1 [shape = 'u32[144,128]{1,0:T(1,128)}', space=vmem, size = 0x12000, scoped, tag = 'internal scratch']
  %s0 = inlined_call_operand.vmem [shape: f32[2,96,64], index: 0, kind: input, shape index: {}]
  %s1 = inlined_call_operand.vmem [shape: f32[1,64], index: 1, kind: input, shape index: {}]
  %s2 = inlined_call_operand.vmem [shape: f32[1,64], index: 2, kind: input, shape index: {}]
  %s3 = inlined_call_operand.vmem [shape: bf16[64,192], index: 3, kind: input, shape index: {}]
  %s4 = inlined_call_operand.vmem [shape: f32[1,192], index: 4, kind: input, shape index: {}]
  %s5 = inlined_call_operand.vmem [shape: bf16[2,4,96,16], index: 5, kind: output, shape index: {0}]
  %s6 = inlined_call_operand.vmem [shape: bf16[2,4,96,16], index: 6, kind: output, shape index: {1}]
  %s7 = inlined_call_operand.vmem [shape: bf16[2,4,96,16], index: 7, kind: output, shape index: {2}]
  %8 = xla_tuple %s5, %s6, %s7
  %s9 = sld [smem:[#allocation0]]
  $region180: #{tpu_custom_call.1} parent=0
    _
  %s11 = ssub.s32 1, %s9
  %s12 = scalar_select 0, %s11, %s9
  $region1: #{tpu_custom_call.1} parent=0
    #allocation2 [shape = 'u8[65536]{0}', space=vmem, size = 0x10000, scoped, tag = 'output window, operand 0']
    #allocation3 [shape = 'u8[65536]{0}', space=vmem, size = 0x10000, scoped, tag = 'output window, operand 1']
    #allocation4 [shape = 'u8[65536]{0}', space=vmem, size = 0x10000, scoped, tag = 'output window, operand 2']
    loop: start=0, step=1, limit=8
    $region2: #{tpu_custom_call.1} parent=1 // loop_pre_header
      _
    $region3: #{tpu_custom_call.1} parent=1 // loop_header
      %s14 = sphi 0, %s18
      %p15 = scmp.ge.s32.totalorder %s14, 8
      %s21 = sphi 0, %s33
      %s22 = sphi 0, %s29
      %s23 = sphi 0, %s21
      %s24 = sphi 0, %s22
      %s25 = sphi 0, %s23
      %s26 = sphi 0, %s24
      %s38 = sphi 0, %s40
      %s41 = sphi 0, %s38
      %s42 = sphi 0, %s41
      %s58 = sphi 0, %s42
      %s62 = sphi 0, %s62
      %s64 = sphi 0, %s62
      %s65 = sphi 0, %s64
      %s79 = sphi 0, %s65
      %s83 = sphi 0, %s83
      %s85 = sphi 0, %s83
      %s86 = sphi 0, %s85
      %s100 = sphi 0, %s86
      %s104 = sphi 0, %s104
      %s106 = sphi 0, %s104
      %s107 = sphi 0, %s106
      %s121 = sphi 0, %s107
      %s125 = sphi 0, %s125
      %s127 = sphi 0, %s125
      %s128 = sphi 0, %s127
      %s142 = sphi 0, %s128
      %s150 = sphi 0, %s152
      %s153 = sphi 0, %s150
      %s154 = sphi 0, %s153
      %s170 = sphi 0, %s154
      %s178 = sphi 0, %s180
      %s181 = sphi 0, %s178
      %s182 = sphi 0, %s181
      %s198 = sphi 0, %s182
      %s206 = sphi 0, %s208
      %s209 = sphi 0, %s206
      %s210 = sphi 0, %s209
      %s226 = sphi 0, %s210
    $region4: #{tpu_custom_call.1} parent=1 // loop_header_branch
      %17 = sbr.rel (%p15) target = $region8
    $region5: #{tpu_custom_call.1} parent=1 // loop_body
      %s19 = ssub.s32 %s14, 1
      %s20 = ssub.s32 %s14, 2
      %s27 = sadd.s32 1, %s22
      %p28 = scmp.ge.s32.totalorder %s27, 3
      %s29 = scalar_select %p28, 0, %s27
      %s30 = sadd.s32 1, %s21
      %s31 = scalar_select %p28, %s30, %s21
      %p32 = scmp.ge.s32.totalorder %s31, 2
      %s33 = scalar_select %p32, 0, %s31
      %s34 = ssub.s32 %s21, %s33
      %s35 = ssub.s32 %s22, %s29
      %s36 = sor.u32 %s34, %s35
      %p37 = scmp.eq.s32.totalorder %s36, 0
      %s39 = sadd.s32 %s38, 1
      %s40 = scalar_select %p37, %s38, %s39
      %p43 = pneg %p37
      %p44 = scmp.eq.s32.totalorder %s14, 5
      %p45 = por %p43, %p44
      %p46 = scmp.ne.s32.totalorder %s38, %s41
      %p47 = scmp.eq.s32.totalorder %s14, 0
      %p48 = por %p46, %p47
      %p49 = scmp.ne.s32.totalorder %s38, %s41
      %p50 = scmp.eq.s32.totalorder %s19, 5
      %p51 = por %p49, %p50
      %p52 = scmp.ne.s32.totalorder %s41, %s42
      %p53 = scmp.eq.s32.totalorder %s19, 0
      %p54 = por %p52, %p53
      %p55 = scmp.ne.s32.totalorder %s41, %s42
      %p56 = scmp.eq.s32.totalorder %s20, 5
      %p57 = por %p55, %p56
      %p59 = scmp.ne.s32.totalorder %s42, %s58
      %p60 = scmp.eq.s32.totalorder %s20, 0
      %p61 = por %p59, %p60
      %s63 = sadd.s32 %s62, 1
      %p66 = scmp.eq.s32.totalorder %s14, 5
      %p67 = scmp.ne.s32.totalorder %s62, %s64
      %p68 = scmp.eq.s32.totalorder %s14, 0
      %p69 = por %p67, %p68
      %p70 = scmp.ne.s32.totalorder %s62, %s64
      %p71 = scmp.eq.s32.totalorder %s19, 5
      %p72 = por %p70, %p71
      %p73 = scmp.ne.s32.totalorder %s64, %s65
      %p74 = scmp.eq.s32.totalorder %s19, 0
      %p75 = por %p73, %p74
      %p76 = scmp.ne.s32.totalorder %s64, %s65
      %p77 = scmp.eq.s32.totalorder %s20, 5
      %p78 = por %p76, %p77
      %p80 = scmp.ne.s32.totalorder %s65, %s79
      %p81 = scmp.eq.s32.totalorder %s20, 0
      %p82 = por %p80, %p81
      %s84 = sadd.s32 %s83, 1
      %p87 = scmp.eq.s32.totalorder %s14, 5
      %p88 = scmp.ne.s32.totalorder %s83, %s85
      %p89 = scmp.eq.s32.totalorder %s14, 0
      %p90 = por %p88, %p89
      %p91 = scmp.ne.s32.totalorder %s83, %s85
      %p92 = scmp.eq.s32.totalorder %s19, 5
      %p93 = por %p91, %p92
      %p94 = scmp.ne.s32.totalorder %s85, %s86
      %p95 = scmp.eq.s32.totalorder %s19, 0
      %p96 = por %p94, %p95
      %p97 = scmp.ne.s32.totalorder %s85, %s86
      %p98 = scmp.eq.s32.totalorder %s20, 5
      %p99 = por %p97, %p98
      %p101 = scmp.ne.s32.totalorder %s86, %s100
      %p102 = scmp.eq.s32.totalorder %s20, 0
      %p103 = por %p101, %p102
      %s105 = sadd.s32 %s104, 1
      %p108 = scmp.eq.s32.totalorder %s14, 5
      %p109 = scmp.ne.s32.totalorder %s104, %s106
      %p110 = scmp.eq.s32.totalorder %s14, 0
      %p111 = por %p109, %p110
      %p112 = scmp.ne.s32.totalorder %s104, %s106
      %p113 = scmp.eq.s32.totalorder %s19, 5
      %p114 = por %p112, %p113
      %p115 = scmp.ne.s32.totalorder %s106, %s107
      %p116 = scmp.eq.s32.totalorder %s19, 0
      %p117 = por %p115, %p116
      %p118 = scmp.ne.s32.totalorder %s106, %s107
      %p119 = scmp.eq.s32.totalorder %s20, 5
      %p120 = por %p118, %p119
      %p122 = scmp.ne.s32.totalorder %s107, %s121
      %p123 = scmp.eq.s32.totalorder %s20, 0
      %p124 = por %p122, %p123
      %s126 = sadd.s32 %s125, 1
      %p129 = scmp.eq.s32.totalorder %s14, 5
      %p130 = scmp.ne.s32.totalorder %s125, %s127
      %p131 = scmp.eq.s32.totalorder %s14, 0
      %p132 = por %p130, %p131
      %p133 = scmp.ne.s32.totalorder %s125, %s127
      %p134 = scmp.eq.s32.totalorder %s19, 5
      %p135 = por %p133, %p134
      %p136 = scmp.ne.s32.totalorder %s127, %s128
      %p137 = scmp.eq.s32.totalorder %s19, 0
      %p138 = por %p136, %p137
      %p139 = scmp.ne.s32.totalorder %s127, %s128
      %p140 = scmp.eq.s32.totalorder %s20, 5
      %p141 = por %p139, %p140
      %p143 = scmp.ne.s32.totalorder %s128, %s142
      %p144 = scmp.eq.s32.totalorder %s20, 0
      %p145 = por %p143, %p144
      %s146 = ssub.s32 %s21, %s33
      %s147 = ssub.s32 %s22, %s29
      %s148 = sor.u32 %s146, %s147
      %p149 = scmp.eq.s32.totalorder %s148, 0
      %s151 = sadd.s32 %s150, 1
      %s152 = scalar_select %p149, %s150, %s151
      %p155 = pneg %p149
      %p156 = scmp.eq.s32.totalorder %s14, 5
      %p157 = por %p155, %p156
      %p158 = scmp.ne.s32.totalorder %s150, %s153
      %p159 = scmp.eq.s32.totalorder %s14, 0
      %p160 = por %p158, %p159
      %p161 = scmp.ne.s32.totalorder %s150, %s153
      %p162 = scmp.eq.s32.totalorder %s19, 5
      %p163 = por %p161, %p162
      %p164 = scmp.ne.s32.totalorder %s153, %s154
      %p165 = scmp.eq.s32.totalorder %s19, 0
      %p166 = por %p164, %p165
      %p167 = scmp.ne.s32.totalorder %s153, %s154
      %p168 = scmp.eq.s32.totalorder %s20, 5
      %p169 = por %p167, %p168
      %p171 = scmp.ne.s32.totalorder %s154, %s170
      %p172 = scmp.eq.s32.totalorder %s20, 0
      %p173 = por %p171, %p172
      %s174 = ssub.s32 %s21, %s33
      %s175 = ssub.s32 %s22, %s29
      %s176 = sor.u32 %s174, %s175
      %p177 = scmp.eq.s32.totalorder %s176, 0
      %s179 = sadd.s32 %s178, 1
      %s180 = scalar_select %p177, %s178, %s179
      %p183 = pneg %p177
      %p184 = scmp.eq.s32.totalorder %s14, 5
      %p185 = por %p183, %p184
      %p186 = scmp.ne.s32.totalorder %s178, %s181
      %p187 = scmp.eq.s32.totalorder %s14, 0
      %p188 = por %p186, %p187
      %p189 = scmp.ne.s32.totalorder %s178, %s181
      %p190 = scmp.eq.s32.totalorder %s19, 5
      %p191 = por %p189, %p190
      %p192 = scmp.ne.s32.totalorder %s181, %s182
      %p193 = scmp.eq.s32.totalorder %s19, 0
      %p194 = por %p192, %p193
      %p195 = scmp.ne.s32.totalorder %s181, %s182
      %p196 = scmp.eq.s32.totalorder %s20, 5
      %p197 = por %p195, %p196
      %p199 = scmp.ne.s32.totalorder %s182, %s198
      %p200 = scmp.eq.s32.totalorder %s20, 0
      %p201 = por %p199, %p200
      %s202 = ssub.s32 %s21, %s33
      %s203 = ssub.s32 %s22, %s29
      %s204 = sor.u32 %s202, %s203
      %p205 = scmp.eq.s32.totalorder %s204, 0
      %s207 = sadd.s32 %s206, 1
      %s208 = scalar_select %p205, %s206, %s207
      %p211 = pneg %p205
      %p212 = scmp.eq.s32.totalorder %s14, 5
      %p213 = por %p211, %p212
      %p214 = scmp.ne.s32.totalorder %s206, %s209
      %p215 = scmp.eq.s32.totalorder %s14, 0
      %p216 = por %p214, %p215
      %p217 = scmp.ne.s32.totalorder %s206, %s209
      %p218 = scmp.eq.s32.totalorder %s19, 5
      %p219 = por %p217, %p218
      %p220 = scmp.ne.s32.totalorder %s209, %s210
      %p221 = scmp.eq.s32.totalorder %s19, 0
      %p222 = por %p220, %p221
      %p223 = scmp.ne.s32.totalorder %s209, %s210
      %p224 = scmp.eq.s32.totalorder %s20, 5
      %p225 = por %p223, %p224
      %p227 = scmp.ne.s32.totalorder %s210, %s226
      %p228 = scmp.eq.s32.totalorder %s20, 0
      %p229 = por %p227, %p228
      %p230 = scmp.le.s32.totalorder 1, %s14
      %p231 = scmp.lt.s32.totalorder %s14, 7
      %p232 = pnand %p230, %p231
      %p233 = pneg %p232
      // Predicated region
      $region9: #{tpu_custom_call.1} parent=5 // pred_check
        _
      $region10: #{tpu_custom_call.1} parent=5 // pred_check_branch
        %235 = sbr.rel (%p232) target = $region12
      $region11: #{tpu_custom_call.1} parent=5 // pred_region
        %s236 = ssub.s32 %s14, 1
        // Predicated region
        $region13: #{tpu_custom_call.1} parent=11 // pred_check
          %p237 = pneg %p75
        $region14: #{tpu_custom_call.1} parent=11 // pred_check_branch
          %239 = sbr.rel (%p237) target = $region16
        $region15: #{tpu_custom_call.1} parent=11 // pred_region
          _
        $region16: #{tpu_custom_call.1} parent=11 // pred_fallthru
          _
        // Predicated region
        $region17: #{tpu_custom_call.1} parent=11 // pred_check
          %p240 = pneg %p96
        $region18: #{tpu_custom_call.1} parent=11 // pred_check_branch
          %242 = sbr.rel (%p240) target = $region20
        $region19: #{tpu_custom_call.1} parent=11 // pred_region
          _
        $region20: #{tpu_custom_call.1} parent=11 // pred_fallthru
          _
        // Predicated region
        $region21: #{tpu_custom_call.1} parent=11 // pred_check
          %p243 = pneg %p117
        $region22: #{tpu_custom_call.1} parent=11 // pred_check_branch
          %245 = sbr.rel (%p243) target = $region24
        $region23: #{tpu_custom_call.1} parent=11 // pred_region
          _
        $region24: #{tpu_custom_call.1} parent=11 // pred_fallthru
          _
        // Predicated region
        $region25: #{tpu_custom_call.1} parent=11 // pred_check
          %p246 = pneg %p138
        $region26: #{tpu_custom_call.1} parent=11 // pred_check_branch
          %248 = sbr.rel (%p246) target = $region28
        $region27: #{tpu_custom_call.1} parent=11 // pred_region
          _
        $region28: #{tpu_custom_call.1} parent=11 // pred_fallthru
          _
      $region12: #{tpu_custom_call.1} parent=5 // pred_fallthru
        _
      %p249 = scmp.lt.s32.totalorder %s14, 6
      // Predicated region
      $region29: #{tpu_custom_call.1} parent=5 // pred_check
        %p250 = pneg %p249
      $region30: #{tpu_custom_call.1} parent=5 // pred_check_branch
        %252 = sbr.rel (%p250) target = $region32
      $region31: #{tpu_custom_call.1} parent=5 // pred_region
        // Predicated region
        $region33: #{tpu_custom_call.1} parent=31 // pred_check
          %p253 = pneg %p48
        $region34: #{tpu_custom_call.1} parent=31 // pred_check_branch
          %255 = sbr.rel (%p253) target = $region36
        $region35: #{tpu_custom_call.1} parent=31 // pred_region
          %s256 = smul.u32 4, %s22
          %p257 = scmp.lt.s32.totalorder %s21, 1
          %s258 = scalar_select %p257, %s21, 1
          %p259 = scmp.lt.s32.totalorder %s256, 11
          %s260 = scalar_select %p259, %s256, 11
          %s261 = smul.addr %s258, 12
          %s262 = sadd.s32 %s260, %s261
          %s263 = smul.addr %s262, 8
          %s264 = scalar_lea.vmem %s0, %s263
          %s265 = smul.u32 4, %s22
        $region36: #{tpu_custom_call.1} parent=31 // pred_fallthru
          _
      $region32: #{tpu_custom_call.1} parent=5 // pred_fallthru
        _
      %p266 = scmp.le.s32.totalorder 1, %s14
      %p267 = scmp.lt.s32.totalorder %s14, 7
      %p268 = pnand %p266, %p267
      %p269 = pneg %p268
      // Predicated region
      $region37: #{tpu_custom_call.1} parent=5 // pred_check
        _
      $region38: #{tpu_custom_call.1} parent=5 // pred_check_branch
        %271 = sbr.rel (%p268) target = $region40
      $region39: #{tpu_custom_call.1} parent=5 // pred_region
        %s272 = ssub.s32 %s14, 1
        %s273 = smul.u32 4, %s24
        %p274 = scmp.lt.s32.totalorder %s23, 1
        %s275 = scalar_select %p274, %s23, 1
        %p276 = scmp.lt.s32.totalorder %s273, 11
        %s277 = scalar_select %p276, %s273, 11
        %s278 = smul.addr %s275, 12
        %s279 = sadd.s32 %s277, %s278
        %s280 = smul.addr %s279, 8
        %s281 = scalar_lea.vmem %s0, %s280
        %p282 = pneg %p54
        %p283 = pneg %p51
        %p284 = pneg %p75
        %p285 = pneg %p72
        %p286 = pneg %p96
        %p287 = pneg %p93
        %p288 = pneg %p117
        %p289 = pneg %p114
        %p290 = pneg %p138
        %p291 = pneg %p135
        %p292 = pneg %p166
        %p293 = pneg %p163
        %s294 = sand.u32 %s153, 1
        %s295 = sand.u32 %s153, 1
        %s296 = smul.addr %s295, 64
        %s297 = scalar_lea.vmem [#allocation2], %s296
        %p298 = pneg %p194
        %p299 = pneg %p191
        %s300 = sand.u32 %s181, 1
        %s301 = sand.u32 %s181, 1
        %s302 = smul.addr %s301, 64
        %s303 = scalar_lea.vmem [#allocation3], %s302
        %p304 = pneg %p222
        %p305 = pneg %p219
        %s306 = sand.u32 %s209, 1
        %s307 = sand.u32 %s209, 1
        %s308 = smul.addr %s307, 64
        %s309 = scalar_lea.vmem [#allocation4], %s308
        %s310 = smul.u32 4, %s24
        %p311 = scmp.lt.s32.totalorder %s23, 1
        %s312 = scalar_select %p311, %s23, 1
        %p313 = scmp.lt.s32.totalorder %s310, 11
        %s314 = scalar_select %p313, %s310, 11
        %s315 = smul.addr %s312, 12
        %s316 = sadd.s32 %s314, %s315
        %s317 = smul.addr %s316, 8
        %s318 = scalar_lea.vmem %s0, %s317
        %s319 = smul.u32 4, %s24
        %s320 = smul.u32 4, %s24
        %s321 = smul.u32 4, %s24
        %s322 = smul.u32 4, %s24
        %v324 = vld [vmem:[%s318] sm:$0xff]
        %v325 = vld [vmem:[%s318 + $0x8] sm:$0xff]
        %v326 = vld [vmem:[%s318 + $0x10] sm:$0xff]
        %v327 = vld [vmem:[%s318 + $0x18] sm:$0xff]
        %v328 = vld [vmem:[%s1] sm:$0x1]
        %v329 = vld [vmem:[%s2] sm:$0x1]
        %vm330 = vcmask 523264
        %v331 = vsel %vm330, %v324, 0.0
        %332 = vadd.xlane.f32.xlu0 %v331
        %v333 = vpop.xlane.xlu0 %332
        %v334 = vsel %vm330, %v325, 0.0
        %335 = vadd.xlane.f32.xlu0 %v334
        %v336 = vpop.xlane.xlu0 %335
        %v337 = vsel %vm330, %v326, 0.0
        %338 = vadd.xlane.f32.xlu0 %v337
        %v339 = vpop.xlane.xlu0 %338
        %v340 = vsel %vm330, %v327, 0.0
        %341 = vadd.xlane.f32.xlu0 %v340
        %v342 = vpop.xlane.xlu0 %341
        %v343 = vrcp.pop 64.0
        %v344 = vmul.f32 %v333, %v343
        %v345 = vmul.f32 %v336, %v343
        %v346 = vmul.f32 %v339, %v343
        %v347 = vmul.f32 %v342, %v343
        %v348 = vsub.f32 %v324, %v344
        %v349 = vsub.f32 %v325, %v345
        %v350 = vsub.f32 %v326, %v346
        %v351 = vsub.f32 %v327, %v347
        %v352 = vmul.f32 %v348, %v348
        %v353 = vmul.f32 %v349, %v349
        %v354 = vmul.f32 %v350, %v350
        %v355 = vmul.f32 %v351, %v351
        %v356 = vsel %vm330, %v352, 0.0
        %357 = vadd.xlane.f32.xlu0 %v356
        %v358 = vpop.xlane.xlu0 %357
        %v359 = vsel %vm330, %v353, 0.0
        %360 = vadd.xlane.f32.xlu0 %v359
        %v361 = vpop.xlane.xlu0 %360
        %v362 = vsel %vm330, %v354, 0.0
        %363 = vadd.xlane.f32.xlu0 %v362
        %v364 = vpop.xlane.xlu0 %363
        %v365 = vsel %vm330, %v355, 0.0
        %366 = vadd.xlane.f32.xlu0 %v365
        %v367 = vpop.xlane.xlu0 %366
        %v368 = vmul.f32 %v358, %v343
        %v369 = vmul.f32 %v361, %v343
        %v370 = vmul.f32 %v364, %v343
        %v371 = vmul.f32 %v367, %v343
        %v372 = vadd.f32 %v368, 1e-12
        %v373 = vadd.f32 %v369, 1e-12
        %v374 = vadd.f32 %v370, 1e-12
        %v375 = vadd.f32 %v371, 1e-12
        %v376 = vrsqrt.pop %v372
        %v377 = vrsqrt.pop %v373
        %v378 = vrsqrt.pop %v374
        %v379 = vrsqrt.pop %v375
        %v380 = vmul.f32 %v348, %v376
        %v381 = vmul.f32 %v349, %v377
        %v382 = vmul.f32 %v350, %v378
        %v383 = vmul.f32 %v351, %v379
        %v385 = vlaneseq
        %v386 = vshrl.u32 %v385, 7
        %v387 = vsub.s32 0, %v386
        %v388 = vrot.slane %v328, %v387
        %v390 = vmul.f32 %v380, %v388
        %v391 = vmul.f32 %v381, %v388
        %v392 = vmul.f32 %v382, %v388
        %v393 = vmul.f32 %v383, %v388
        %v395 = vlaneseq
        %v396 = vshrl.u32 %v395, 7
        %v397 = vsub.s32 0, %v396
        %v398 = vrot.slane %v329, %v397
        %v400 = vadd.f32 %v390, %v398
        %v401 = vadd.f32 %v391, %v398
        %v402 = vadd.f32 %v392, %v398
        %v403 = vadd.f32 %v393, %v398
        %v404 = vpack.c.bf16 %v401, %v400
        %v405 = vpack.c.bf16 %v403, %v402
        %v406 = vld [vmem:[%s3] sm:$0xff]
        %v407 = vld [vmem:[%s3 + $0x8] sm:$0xff]
        %v408 = vld [vmem:[%s3 + $0x10] sm:$0xff]
        %v409 = vld [vmem:[%s3 + $0x18] sm:$0xff]
        %v410 = vld [vmem:[%s3 + $0x20] sm:$0xff]
        %v411 = vld [vmem:[%s3 + $0x28] sm:$0xff]
        %v412 = vld [vmem:[%s3 + $0x30] sm:$0xff]
        %v413 = vld [vmem:[%s3 + $0x38] sm:$0xff]
        %v414 = vld [vmem:[%s4] sm:$0x3]
        %v416 = vlaneseq
        %v417 = vshrl.u32 %v416, 7
        %v418 = vsub.s32 0, %v417
        %v419 = vrot.slane %v414, %v418
        %v420 = vlaneseq
        %v421 = vshrl.u32 %v420, 7
        %v422 = vsub.s32 1, %v421
        %v423 = vrot.slane %v414, %v422
        %v434 = vunpack.c.l.b16 %v406
        %v435 = vunpack.c.h.b16 %v406
        %v436 = vunpack.c.l.b16 %v407
        %v437 = vunpack.c.h.b16 %v407
        %v438 = vunpack.c.l.b16 %v408
        %v439 = vunpack.c.h.b16 %v408
        %v440 = vunpack.c.l.b16 %v409
        %v441 = vunpack.c.h.b16 %v409
        %v442 = vunpack.c.l.b16 %v410
        %v443 = vunpack.c.h.b16 %v410
        %v444 = vunpack.c.l.b16 %v411
        %v445 = vunpack.c.h.b16 %v411
        %v446 = vunpack.c.l.b16 %v412
        %v447 = vunpack.c.h.b16 %v412
        %v448 = vunpack.c.l.b16 %v413
        %v449 = vunpack.c.h.b16 %v413
        %v450 = vpack.c.b16 %v436, %v434
        %v451 = vpack.c.b16 %v437, %v435
        %v452 = vpack.c.b16 %v440, %v438
        %v453 = vpack.c.b16 %v441, %v439
        %v454 = vpack.c.b16 %v444, %v442
        %v455 = vpack.c.b16 %v445, %v443
        %v456 = vpack.c.b16 %v448, %v446
        %v457 = vpack.c.b16 %v449, %v447
        %v467 = vsel %vm330, %v404, 0
        %v470 = vsel %vm330, %v405, 0
        %472 = vmatprep.subr.bf16.mxu0 0
        %473 = vmatpush1.bf16.msra.mxu0 0
        %474 = vmatprep.subr.bf16.mxu0 0
        %475 = vmatpush1.bf16.msra.mxu0 0
        %476 = vmatprep.subr.bf16.mxu0 0
        %477 = vmatpush1.bf16.msra.mxu0 0
        %478 = vmatprep.subr.bf16.mxu0 0
        %479 = vmatpush1.bf16.msra.mxu0 0
        %480 = vmatprep.subr.bf16.mxu0 %v457
        %481 = vmatpush1.bf16.msra.mxu0 %v456
        %482 = vmatprep.subr.bf16.mxu0 %v455
        %483 = vmatpush1.bf16.msra.mxu0 %v454
        %484 = vmatprep.subr.bf16.mxu0 %v453
        %485 = vmatpush1.bf16.msra.mxu0 %v452
        %486 = vmatprep.subr.bf16.mxu0 %v451
        %487 = vmatpush1.bf16.msra.mxu0 %v450
        %488 = vmatprep.subr.bf16.mxu0 0
        %489 = vmatpush2.bf16.msra.mxu0 0
        %490 = vmatprep.subr.bf16.mxu0 0
        %491 = vmatpush2.bf16.msra.mxu0 0
        %492 = vmatprep.subr.bf16.mxu0 0
        %493 = vmatpush2.bf16.msra.mxu0 0
        %494 = vmatprep.subr.bf16.mxu0 0
        %495 = vmatpush2.bf16.msra.mxu0 0
        %496 = vmatprep.subr.bf16.mxu0 0
        %497 = vmatpush2.bf16.msra.mxu0 0
        %498 = vmatprep.subr.bf16.mxu0 0
        %499 = vmatpush2.bf16.msra.mxu0 0
        %500 = vmatprep.subr.bf16.mxu0 0
        %501 = vmatpush2.bf16.msra.mxu0 0
        %502 = vmatprep.subr.bf16.mxu0 0
        %503 = vmatpush2.bf16.msra.mxu0 0
        %504 = vmatprep.mubr.bf16.mxu0 0
        %505 = vmatmul.mubr.bf16.gmra.mxu0 %v467
        %v506 = vpop.f32.mrf.mxu0
        %v507 = vadd.f32 %v419, %v506
        %v508 = vpop.f32.mrf.mxu0
        %v509 = vadd.f32 %v423, %v508
        %v510 = vpop.f32.mrf.mxu0
        %v511 = vadd.f32 %v419, %v510
        %v512 = vpop.f32.mrf.mxu0
        %v513 = vadd.f32 %v423, %v512
        %514 = vmatprep.mubr.bf16.mxu0 0
        %515 = vmatmul.mubr.bf16.gmra.mxu0 %v470
        %v516 = vpop.f32.mrf.mxu0
        %v517 = vadd.f32 %v419, %v516
        %v518 = vpop.f32.mrf.mxu0
        %v519 = vadd.f32 %v423, %v518
        %v520 = vpop.f32.mrf.mxu0
        %v521 = vadd.f32 %v419, %v520
        %v522 = vpop.f32.mrf.mxu0
        %v523 = vadd.f32 %v423, %v522
        %524 = vdwg.mxu0
        %v525 = vpack.c.bf16 %v511, %v507
        %v526 = vpack.c.bf16 %v513, %v509
        %v527 = vpack.c.bf16 %v521, %v517
        %v528 = vpack.c.bf16 %v523, %v519
        %531 = vrot.lane.b32.xlu0 %v525, 112
        %v532 = vpop.permute.xlu0 %531
        %533 = vrot.lane.b32.xlu0 %v527, 112
        %v534 = vpop.permute.xlu0 %533
        %535 = vrot.lane.b32.xlu0 %v525, 96
        %v536 = vpop.permute.xlu0 %535
        %537 = vrot.lane.b32.xlu0 %v527, 96
        %v538 = vpop.permute.xlu0 %537
        %539 = vrot.lane.b32.xlu0 %v525, 80
        %v540 = vpop.permute.xlu0 %539
        %541 = vrot.lane.b32.xlu0 %v527, 80
        %v542 = vpop.permute.xlu0 %541
        %v545 = vpack.i.b16 %v532, %v525
        %v547 = vshrl.u32 %v525, 16
        %v548 = vshrl.u32 %v532, 16
        %v549 = vpack.i.b16 %v548, %v547
        %v553 = vpack.i.b16 %v540, %v536
        %v555 = vshrl.u32 %v536, 16
        %v556 = vshrl.u32 %v540, 16
        %v557 = vpack.i.b16 %v556, %v555
        %v560 = vpack.i.b16 0, 0
        %v562 = vshrl.u32 0, 16
        %v563 = vpack.i.b16 %v562, %v562
        %v567 = vpack.i.b16 %v534, %v527
        %v569 = vshrl.u32 %v527, 16
        %v570 = vshrl.u32 %v534, 16
        %v571 = vpack.i.b16 %v570, %v569
        %v575 = vpack.i.b16 %v542, %v538
        %v577 = vshrl.u32 %v538, 16
        %v578 = vshrl.u32 %v542, 16
        %v579 = vpack.i.b16 %v578, %v577
        %v581 = vcombine.high %v545, %v560
        %v583 = vunpack.c.l.s4 1983009808
        %v584 = vunpack.c.0.s8 %v583
        %v585 = vlaneseq
        %v586 = vshrl.u32 %v585, 7
        %v587 = vsub.s32 %v584, %v586
        %v588 = vrot.slane %v545, %v587
        %v590 = vunpack.c.l.s4 1983009808
        %v591 = vunpack.c.0.s8 %v590
        %v592 = vlaneseq
        %v593 = vshrl.u32 %v592, 7
        %v594 = vsub.s32 %v591, %v593
        %v595 = vrot.slane %v581, %v594
        %v596 = vcombine.high %v553, %v560
        %v598 = vunpack.c.l.s4 1983009808
        %v599 = vunpack.c.0.s8 %v598
        %v600 = vlaneseq
        %v601 = vshrl.u32 %v600, 7
        %v602 = vsub.s32 %v599, %v601
        %v603 = vrot.slane %v553, %v602
        %v605 = vunpack.c.l.s4 1983009808
        %v606 = vunpack.c.0.s8 %v605
        %v607 = vlaneseq
        %v608 = vshrl.u32 %v607, 7
        %v609 = vsub.s32 %v606, %v608
        %v610 = vrot.slane %v596, %v609
        %v611 = vcombine.low %v588, %v603
        %v612 = vcombine.high %v588, %v603
        %v614 = vunpack.c.l.s4 1934713408
        %v615 = vunpack.c.0.s8 %v614
        %v616 = vlaneseq
        %v617 = vshrl.u32 %v616, 7
        %v618 = vsub.s32 %v615, %v617
        %v619 = vrot.slane %v611, %v618
        %v621 = vunpack.c.l.s4 1934713408
        %v622 = vunpack.c.0.s8 %v621
        %v623 = vlaneseq
        %v624 = vshrl.u32 %v623, 7
        %v625 = vsub.s32 %v622, %v624
        %v626 = vrot.slane %v612, %v625
        %v627 = vcombine.low %v595, %v610
        %v628 = vcombine.high %v595, %v610
        %v630 = vunpack.c.l.s4 1934713408
        %v631 = vunpack.c.0.s8 %v630
        %v632 = vlaneseq
        %v633 = vshrl.u32 %v632, 7
        %v634 = vsub.s32 %v631, %v633
        %v635 = vrot.slane %v627, %v634
        %v637 = vunpack.c.l.s4 1934713408
        %v638 = vunpack.c.0.s8 %v637
        %v639 = vlaneseq
        %v640 = vshrl.u32 %v639, 7
        %v641 = vsub.s32 %v638, %v640
        %v642 = vrot.slane %v628, %v641
        %v643 = vcombine.high %v619, 0
        %v644 = vcombine.high %v626, 0
        %v645 = vcombine.high %v635, 0
        %v646 = vcombine.high %v642, 0
        %v647 = vcombine.high %v549, %v563
        %v649 = vunpack.c.l.s4 1983009808
        %v650 = vunpack.c.0.s8 %v649
        %v651 = vlaneseq
        %v652 = vshrl.u32 %v651, 7
        %v653 = vsub.s32 %v650, %v652
        %v654 = vrot.slane %v549, %v653
        %v656 = vunpack.c.l.s4 1983009808
        %v657 = vunpack.c.0.s8 %v656
        %v658 = vlaneseq
        %v659 = vshrl.u32 %v658, 7
        %v660 = vsub.s32 %v657, %v659
        %v661 = vrot.slane %v647, %v660
        %v662 = vcombine.high %v557, %v563
        %v664 = vunpack.c.l.s4 1983009808
        %v665 = vunpack.c.0.s8 %v664
        %v666 = vlaneseq
        %v667 = vshrl.u32 %v666, 7
        %v668 = vsub.s32 %v665, %v667
        %v669 = vrot.slane %v557, %v668
        %v671 = vunpack.c.l.s4 1983009808
        %v672 = vunpack.c.0.s8 %v671
        %v673 = vlaneseq
        %v674 = vshrl.u32 %v673, 7
        %v675 = vsub.s32 %v672, %v674
        %v676 = vrot.slane %v662, %v675
        %v677 = vcombine.low %v654, %v669
        %v678 = vcombine.high %v654, %v669
        %v680 = vunpack.c.l.s4 1934713408
        %v681 = vunpack.c.0.s8 %v680
        %v682 = vlaneseq
        %v683 = vshrl.u32 %v682, 7
        %v684 = vsub.s32 %v681, %v683
        %v685 = vrot.slane %v677, %v684
        %v687 = vunpack.c.l.s4 1934713408
        %v688 = vunpack.c.0.s8 %v687
        %v689 = vlaneseq
        %v690 = vshrl.u32 %v689, 7
        %v691 = vsub.s32 %v688, %v690
        %v692 = vrot.slane %v678, %v691
        %v693 = vcombine.low %v661, %v676
        %v694 = vcombine.high %v661, %v676
        %v696 = vunpack.c.l.s4 1934713408
        %v697 = vunpack.c.0.s8 %v696
        %v698 = vlaneseq
        %v699 = vshrl.u32 %v698, 7
        %v700 = vsub.s32 %v697, %v699
        %v701 = vrot.slane %v693, %v700
        %v703 = vunpack.c.l.s4 1934713408
        %v704 = vunpack.c.0.s8 %v703
        %v705 = vlaneseq
        %v706 = vshrl.u32 %v705, 7
        %v707 = vsub.s32 %v704, %v706
        %v708 = vrot.slane %v694, %v707
        %v709 = vcombine.high %v685, 0
        %v710 = vcombine.high %v692, 0
        %v711 = vcombine.high %v701, 0
        %v712 = vcombine.high %v708, 0
        %v713 = vcombine.high %v567, %v560
        %v715 = vunpack.c.l.s4 1983009808
        %v716 = vunpack.c.0.s8 %v715
        %v717 = vlaneseq
        %v718 = vshrl.u32 %v717, 7
        %v719 = vsub.s32 %v716, %v718
        %v720 = vrot.slane %v567, %v719
        %v722 = vunpack.c.l.s4 1983009808
        %v723 = vunpack.c.0.s8 %v722
        %v724 = vlaneseq
        %v725 = vshrl.u32 %v724, 7
        %v726 = vsub.s32 %v723, %v725
        %v727 = vrot.slane %v713, %v726
        %v728 = vcombine.high %v575, %v560
        %v730 = vunpack.c.l.s4 1983009808
        %v731 = vunpack.c.0.s8 %v730
        %v732 = vlaneseq
        %v733 = vshrl.u32 %v732, 7
        %v734 = vsub.s32 %v731, %v733
        %v735 = vrot.slane %v575, %v734
        %v737 = vunpack.c.l.s4 1983009808
        %v738 = vunpack.c.0.s8 %v737
        %v739 = vlaneseq
        %v740 = vshrl.u32 %v739, 7
        %v741 = vsub.s32 %v738, %v740
        %v742 = vrot.slane %v728, %v741
        %v743 = vcombine.low %v720, %v735
        %v744 = vcombine.high %v720, %v735
        %v746 = vunpack.c.l.s4 1934713408
        %v747 = vunpack.c.0.s8 %v746
        %v748 = vlaneseq
        %v749 = vshrl.u32 %v748, 7
        %v750 = vsub.s32 %v747, %v749
        %v751 = vrot.slane %v743, %v750
        %v753 = vunpack.c.l.s4 1934713408
        %v754 = vunpack.c.0.s8 %v753
        %v755 = vlaneseq
        %v756 = vshrl.u32 %v755, 7
        %v757 = vsub.s32 %v754, %v756
        %v758 = vrot.slane %v744, %v757
        %v759 = vcombine.low %v727, %v742
        %v760 = vcombine.high %v727, %v742
        %v762 = vunpack.c.l.s4 1934713408
        %v763 = vunpack.c.0.s8 %v762
        %v764 = vlaneseq
        %v765 = vshrl.u32 %v764, 7
        %v766 = vsub.s32 %v763, %v765
        %v767 = vrot.slane %v759, %v766
        %v769 = vunpack.c.l.s4 1934713408
        %v770 = vunpack.c.0.s8 %v769
        %v771 = vlaneseq
        %v772 = vshrl.u32 %v771, 7
        %v773 = vsub.s32 %v770, %v772
        %v774 = vrot.slane %v760, %v773
        %v775 = vcombine.high %v751, 0
        %v776 = vcombine.high %v758, 0
        %v777 = vcombine.high %v767, 0
        %v778 = vcombine.high %v774, 0
        %v779 = vcombine.high %v571, %v563
        %v781 = vunpack.c.l.s4 1983009808
        %v782 = vunpack.c.0.s8 %v781
        %v783 = vlaneseq
        %v784 = vshrl.u32 %v783, 7
        %v785 = vsub.s32 %v782, %v784
        %v786 = vrot.slane %v571, %v785
        %v788 = vunpack.c.l.s4 1983009808
        %v789 = vunpack.c.0.s8 %v788
        %v790 = vlaneseq
        %v791 = vshrl.u32 %v790, 7
        %v792 = vsub.s32 %v789, %v791
        %v793 = vrot.slane %v779, %v792
        %v794 = vcombine.high %v579, %v563
        %v796 = vunpack.c.l.s4 1983009808
        %v797 = vunpack.c.0.s8 %v796
        %v798 = vlaneseq
        %v799 = vshrl.u32 %v798, 7
        %v800 = vsub.s32 %v797, %v799
        %v801 = vrot.slane %v579, %v800
        %v803 = vunpack.c.l.s4 1983009808
        %v804 = vunpack.c.0.s8 %v803
        %v805 = vlaneseq
        %v806 = vshrl.u32 %v805, 7
        %v807 = vsub.s32 %v804, %v806
        %v808 = vrot.slane %v794, %v807
        %v809 = vcombine.low %v786, %v801
        %v810 = vcombine.high %v786, %v801
        %v812 = vunpack.c.l.s4 1934713408
        %v813 = vunpack.c.0.s8 %v812
        %v814 = vlaneseq
        %v815 = vshrl.u32 %v814, 7
        %v816 = vsub.s32 %v813, %v815
        %v817 = vrot.slane %v809, %v816
        %v819 = vunpack.c.l.s4 1934713408
        %v820 = vunpack.c.0.s8 %v819
        %v821 = vlaneseq
        %v822 = vshrl.u32 %v821, 7
        %v823 = vsub.s32 %v820, %v822
        %v824 = vrot.slane %v810, %v823
        %v825 = vcombine.low %v793, %v808
        %v826 = vcombine.high %v793, %v808
        %v828 = vunpack.c.l.s4 1934713408
        %v829 = vunpack.c.0.s8 %v828
        %v830 = vlaneseq
        %v831 = vshrl.u32 %v830, 7
        %v832 = vsub.s32 %v829, %v831
        %v833 = vrot.slane %v825, %v832
        %v835 = vunpack.c.l.s4 1934713408
        %v836 = vunpack.c.0.s8 %v835
        %v837 = vlaneseq
        %v838 = vshrl.u32 %v837, 7
        %v839 = vsub.s32 %v836, %v838
        %v840 = vrot.slane %v826, %v839
        %v841 = vcombine.high %v817, 0
        %v842 = vcombine.high %v824, 0
        %v843 = vcombine.high %v833, 0
        %v844 = vcombine.high %v840, 0
        %v845 = vcombine.low %v619, %v626
        %v847 = vunpack.c.l.s4 1983009808
        %v848 = vunpack.c.0.s8 %v847
        %v849 = vlaneseq
        %v850 = vshrl.u32 %v849, 7
        %v851 = vsub.s32 %v848, %v850
        %v852 = vrot.slane %v845, %v851
        %v853 = vcombine.low %v643, %v644
        %v855 = vunpack.c.l.s4 1983009808
        %v856 = vunpack.c.0.s8 %v855
        %v857 = vlaneseq
        %v858 = vshrl.u32 %v857, 7
        %v859 = vsub.s32 %v856, %v858
        %v860 = vrot.slane %v853, %v859
        %v861 = vcombine.low %v635, %v642
        %v863 = vunpack.c.l.s4 1983009808
        %v864 = vunpack.c.0.s8 %v863
        %v865 = vlaneseq
        %v866 = vshrl.u32 %v865, 7
        %v867 = vsub.s32 %v864, %v866
        %v868 = vrot.slane %v861, %v867
        %v869 = vcombine.low %v645, %v646
        %v871 = vunpack.c.l.s4 1983009808
        %v872 = vunpack.c.0.s8 %v871
        %v873 = vlaneseq
        %v874 = vshrl.u32 %v873, 7
        %v875 = vsub.s32 %v872, %v874
        %v876 = vrot.slane %v869, %v875
        %v877 = vcombine.low %v852, %v860
        %v879 = vunpack.c.l.s4 1934713408
        %v880 = vunpack.c.0.s8 %v879
        %v881 = vlaneseq
        %v882 = vshrl.u32 %v881, 7
        %v883 = vsub.s32 %v880, %v882
        %v884 = vrot.slane %v877, %v883
        %v885 = vcombine.low %v868, %v876
        %v887 = vunpack.c.l.s4 1934713408
        %v888 = vunpack.c.0.s8 %v887
        %v889 = vlaneseq
        %v890 = vshrl.u32 %v889, 7
        %v891 = vsub.s32 %v888, %v890
        %v892 = vrot.slane %v885, %v891
        %v893 = vcombine.low %v884, %v892
        %v894 = vcombine.high %v884, %v892
        %v895 = vcombine.low %v685, %v692
        %v897 = vunpack.c.l.s4 1983009808
        %v898 = vunpack.c.0.s8 %v897
        %v899 = vlaneseq
        %v900 = vshrl.u32 %v899, 7
        %v901 = vsub.s32 %v898, %v900
        %v902 = vrot.slane %v895, %v901
        %v903 = vcombine.low %v709, %v710
        %v905 = vunpack.c.l.s4 1983009808
        %v906 = vunpack.c.0.s8 %v905
        %v907 = vlaneseq
        %v908 = vshrl.u32 %v907, 7
        %v909 = vsub.s32 %v906, %v908
        %v910 = vrot.slane %v903, %v909
        %v911 = vcombine.low %v701, %v708
        %v913 = vunpack.c.l.s4 1983009808
        %v914 = vunpack.c.0.s8 %v913
        %v915 = vlaneseq
        %v916 = vshrl.u32 %v915, 7
        %v917 = vsub.s32 %v914, %v916
        %v918 = vrot.slane %v911, %v917
        %v919 = vcombine.low %v711, %v712
        %v921 = vunpack.c.l.s4 1983009808
        %v922 = vunpack.c.0.s8 %v921
        %v923 = vlaneseq
        %v924 = vshrl.u32 %v923, 7
        %v925 = vsub.s32 %v922, %v924
        %v926 = vrot.slane %v919, %v925
        %v927 = vcombine.low %v902, %v910
        %v929 = vunpack.c.l.s4 1934713408
        %v930 = vunpack.c.0.s8 %v929
        %v931 = vlaneseq
        %v932 = vshrl.u32 %v931, 7
        %v933 = vsub.s32 %v930, %v932
        %v934 = vrot.slane %v927, %v933
        %v935 = vcombine.low %v918, %v926
        %v937 = vunpack.c.l.s4 1934713408
        %v938 = vunpack.c.0.s8 %v937
        %v939 = vlaneseq
        %v940 = vshrl.u32 %v939, 7
        %v941 = vsub.s32 %v938, %v940
        %v942 = vrot.slane %v935, %v941
        %v943 = vcombine.low %v934, %v942
        %v944 = vcombine.high %v934, %v942
        %v945 = vcombine.low %v751, %v758
        %v947 = vunpack.c.l.s4 1983009808
        %v948 = vunpack.c.0.s8 %v947
        %v949 = vlaneseq
        %v950 = vshrl.u32 %v949, 7
        %v951 = vsub.s32 %v948, %v950
        %v952 = vrot.slane %v945, %v951
        %v953 = vcombine.low %v775, %v776
        %v955 = vunpack.c.l.s4 1983009808
        %v956 = vunpack.c.0.s8 %v955
        %v957 = vlaneseq
        %v958 = vshrl.u32 %v957, 7
        %v959 = vsub.s32 %v956, %v958
        %v960 = vrot.slane %v953, %v959
        %v961 = vcombine.low %v767, %v774
        %v963 = vunpack.c.l.s4 1983009808
        %v964 = vunpack.c.0.s8 %v963
        %v965 = vlaneseq
        %v966 = vshrl.u32 %v965, 7
        %v967 = vsub.s32 %v964, %v966
        %v968 = vrot.slane %v961, %v967
        %v969 = vcombine.low %v777, %v778
        %v971 = vunpack.c.l.s4 1983009808
        %v972 = vunpack.c.0.s8 %v971
        %v973 = vlaneseq
        %v974 = vshrl.u32 %v973, 7
        %v975 = vsub.s32 %v972, %v974
        %v976 = vrot.slane %v969, %v975
        %v977 = vcombine.low %v952, %v960
        %v979 = vunpack.c.l.s4 1934713408
        %v980 = vunpack.c.0.s8 %v979
        %v981 = vlaneseq
        %v982 = vshrl.u32 %v981, 7
        %v983 = vsub.s32 %v980, %v982
        %v984 = vrot.slane %v977, %v983
        %v985 = vcombine.low %v968, %v976
        %v987 = vunpack.c.l.s4 1934713408
        %v988 = vunpack.c.0.s8 %v987
        %v989 = vlaneseq
        %v990 = vshrl.u32 %v989, 7
        %v991 = vsub.s32 %v988, %v990
        %v992 = vrot.slane %v985, %v991
        %v993 = vcombine.low %v984, %v992
        %v994 = vcombine.high %v984, %v992
        %v995 = vcombine.low %v817, %v824
        %v997 = vunpack.c.l.s4 1983009808
        %v998 = vunpack.c.0.s8 %v997
        %v999 = vlaneseq
        %v1000 = vshrl.u32 %v999, 7
        %v1001 = vsub.s32 %v998, %v1000
        %v1002 = vrot.slane %v995, %v1001
        %v1003 = vcombine.low %v841, %v842
        %v1005 = vunpack.c.l.s4 1983009808
        %v1006 = vunpack.c.0.s8 %v1005
        %v1007 = vlaneseq
        %v1008 = vshrl.u32 %v1007, 7
        %v1009 = vsub.s32 %v1006, %v1008
        %v1010 = vrot.slane %v1003, %v1009
        %v1011 = vcombine.low %v833, %v840
        %v1013 = vunpack.c.l.s4 1983009808
        %v1014 = vunpack.c.0.s8 %v1013
        %v1015 = vlaneseq
        %v1016 = vshrl.u32 %v1015, 7
        %v1017 = vsub.s32 %v1014, %v1016
        %v1018 = vrot.slane %v1011, %v1017
        %v1019 = vcombine.low %v843, %v844
        %v1021 = vunpack.c.l.s4 1983009808
        %v1022 = vunpack.c.0.s8 %v1021
        %v1023 = vlaneseq
        %v1024 = vshrl.u32 %v1023, 7
        %v1025 = vsub.s32 %v1022, %v1024
        %v1026 = vrot.slane %v1019, %v1025
        %v1027 = vcombine.low %v1002, %v1010
        %v1029 = vunpack.c.l.s4 1934713408
        %v1030 = vunpack.c.0.s8 %v1029
        %v1031 = vlaneseq
        %v1032 = vshrl.u32 %v1031, 7
        %v1033 = vsub.s32 %v1030, %v1032
        %v1034 = vrot.slane %v1027, %v1033
        %v1035 = vcombine.low %v1018, %v1026
        %v1037 = vunpack.c.l.s4 1934713408
        %v1038 = vunpack.c.0.s8 %v1037
        %v1039 = vlaneseq
        %v1040 = vshrl.u32 %v1039, 7
        %v1041 = vsub.s32 %v1038, %v1040
        %v1042 = vrot.slane %v1035, %v1041
        %v1043 = vcombine.low %v1034, %v1042
        %v1044 = vcombine.high %v1034, %v1042
        %v1047 = vpack.i.b16 %v943, %v893
        %v1048 = vshrl.u32 %v893, 16
        %v1049 = vshrl.u32 %v943, 16
        %v1050 = vpack.i.b16 %v1049, %v1048
        %v1053 = vpack.i.b16 %v944, %v894
        %v1054 = vshrl.u32 %v894, 16
        %v1055 = vshrl.u32 %v944, 16
        %v1056 = vpack.i.b16 %v1055, %v1054
        %v1059 = vpack.i.b16 %v1043, %v993
        %v1060 = vshrl.u32 %v993, 16
        %v1061 = vshrl.u32 %v1043, 16
        %v1062 = vpack.i.b16 %v1061, %v1060
        %v1065 = vpack.i.b16 %v1044, %v994
        %v1066 = vshrl.u32 %v994, 16
        %v1067 = vshrl.u32 %v1044, 16
        %v1068 = vpack.i.b16 %v1067, %v1066
        %v1069 = vunpack.c.l.b16 %v1047
        %v1070 = vunpack.c.h.b16 %v1047
        %v1071 = vunpack.c.l.b16 %v1059
        %v1072 = vunpack.c.h.b16 %v1059
        %v1073 = vunpack.c.l.b16 %v1050
        %v1074 = vunpack.c.h.b16 %v1050
        %v1075 = vunpack.c.l.b16 %v1062
        %v1076 = vunpack.c.h.b16 %v1062
        %v1077 = vunpack.c.l.b16 %v1053
        %v1078 = vunpack.c.h.b16 %v1053
        %v1079 = vunpack.c.l.b16 %v1065
        %v1080 = vunpack.c.h.b16 %v1065
        %v1081 = vunpack.c.l.b16 %v1056
        %v1082 = vunpack.c.h.b16 %v1056
        %v1083 = vunpack.c.l.b16 %v1068
        %v1084 = vunpack.c.h.b16 %v1068
        %v1085 = vpack.c.b16 %v1069, %v1069
        %v1086 = vpack.c.b16 %v1070, %v1070
        %v1087 = vpack.c.b16 %v1071, %v1071
        %v1088 = vpack.c.b16 %v1072, %v1072
        %v1089 = vpack.c.b16 %v1073, %v1073
        %v1090 = vpack.c.b16 %v1074, %v1074
        %v1091 = vpack.c.b16 %v1075, %v1075
        %v1092 = vpack.c.b16 %v1076, %v1076
        %v1093 = vpack.c.b16 %v1077, %v1077
        %v1094 = vpack.c.b16 %v1078, %v1078
        %v1095 = vpack.c.b16 %v1079, %v1079
        %v1096 = vpack.c.b16 %v1080, %v1080
        %v1097 = vpack.c.b16 %v1081, %v1081
        %v1098 = vpack.c.b16 %v1082, %v1082
        %v1099 = vpack.c.b16 %v1083, %v1083
        %v1100 = vpack.c.b16 %v1084, %v1084
        %vm1117 = vcmask 125952
        %1118 = vst.msk [vmem:[%s297] sm:$0xf] %vm1117, %v1085
        %1119 = vst.msk [vmem:[%s297 + $0x4] sm:$0xf] %vm1117, %v1086
        %1120 = vst.msk [vmem:[%s297 + $0x8] sm:$0xf] %vm1117, %v1087
        %1121 = vst.msk [vmem:[%s297 + $0xc] sm:$0xf] %vm1117, %v1088
        %1122 = vst.msk [vmem:[%s297 + $0x10] sm:$0xf] %vm1117, %v1089
        %1123 = vst.msk [vmem:[%s297 + $0x14] sm:$0xf] %vm1117, %v1090
        %1124 = vst.msk [vmem:[%s297 + $0x18] sm:$0xf] %vm1117, %v1091
        %1125 = vst.msk [vmem:[%s297 + $0x1c] sm:$0xf] %vm1117, %v1092
        %1126 = vst.msk [vmem:[%s297 + $0x20] sm:$0xf] %vm1117, %v1093
        %1127 = vst.msk [vmem:[%s297 + $0x24] sm:$0xf] %vm1117, %v1094
        %1128 = vst.msk [vmem:[%s297 + $0x28] sm:$0xf] %vm1117, %v1095
        %1129 = vst.msk [vmem:[%s297 + $0x2c] sm:$0xf] %vm1117, %v1096
        %1130 = vst.msk [vmem:[%s297 + $0x30] sm:$0xf] %vm1117, %v1097
        %1131 = vst.msk [vmem:[%s297 + $0x34] sm:$0xf] %vm1117, %v1098
        %1132 = vst.msk [vmem:[%s297 + $0x38] sm:$0xf] %vm1117, %v1099
        %1133 = vst.msk [vmem:[%s297 + $0x3c] sm:$0xf] %vm1117, %v1100
        %1134 = vrot.lane.b32.xlu0 %v525, 64
        %v1135 = vpop.permute.xlu0 %1134
        %1136 = vrot.lane.b32.xlu0 %v527, 64
        %v1137 = vpop.permute.xlu0 %1136
        %1138 = vrot.lane.b32.xlu0 %v532, 64
        %v1139 = vpop.permute.xlu0 %1138
        %1140 = vrot.lane.b32.xlu0 %v534, 64
        %v1141 = vpop.permute.xlu0 %1140
        %1142 = vrot.lane.b32.xlu0 %v536, 64
        %v1143 = vpop.permute.xlu0 %1142
        %1144 = vrot.lane.b32.xlu0 %v538, 64
        %v1145 = vpop.permute.xlu0 %1144
        %1146 = vrot.lane.b32.xlu0 %v540, 64
        %v1147 = vpop.permute.xlu0 %1146
        %1148 = vrot.lane.b32.xlu0 %v542, 64
        %v1149 = vpop.permute.xlu0 %1148
        %v1152 = vpack.i.b16 %v1139, %v1135
        %v1154 = vshrl.u32 %v1135, 16
        %v1155 = vshrl.u32 %v1139, 16
        %v1156 = vpack.i.b16 %v1155, %v1154
        %v1160 = vpack.i.b16 %v1147, %v1143
        %v1162 = vshrl.u32 %v1143, 16
        %v1163 = vshrl.u32 %v1147, 16
        %v1164 = vpack.i.b16 %v1163, %v1162
        %v1168 = vpack.i.b16 %v1141, %v1137
        %v1170 = vshrl.u32 %v1137, 16
        %v1171 = vshrl.u32 %v1141, 16
        %v1172 = vpack.i.b16 %v1171, %v1170
        %v1176 = vpack.i.b16 %v1149, %v1145
        %v1178 = vshrl.u32 %v1145, 16
        %v1179 = vshrl.u32 %v1149, 16
        %v1180 = vpack.i.b16 %v1179, %v1178
        %v1182 = vcombine.high %v1152, %v560
        %v1184 = vunpack.c.l.s4 1983009808
        %v1185 = vunpack.c.0.s8 %v1184
        %v1186 = vlaneseq
        %v1187 = vshrl.u32 %v1186, 7
        %v1188 = vsub.s32 %v1185, %v1187
        %v1189 = vrot.slane %v1152, %v1188
        %v1191 = vunpack.c.l.s4 1983009808
        %v1192 = vunpack.c.0.s8 %v1191
        %v1193 = vlaneseq
        %v1194 = vshrl.u32 %v1193, 7
        %v1195 = vsub.s32 %v1192, %v1194
        %v1196 = vrot.slane %v1182, %v1195
        %v1197 = vcombine.high %v1160, %v560
        %v1199 = vunpack.c.l.s4 1983009808
        %v1200 = vunpack.c.0.s8 %v1199
        %v1201 = vlaneseq
        %v1202 = vshrl.u32 %v1201, 7
        %v1203 = vsub.s32 %v1200, %v1202
        %v1204 = vrot.slane %v1160, %v1203
        %v1206 = vunpack.c.l.s4 1983009808
        %v1207 = vunpack.c.0.s8 %v1206
        %v1208 = vlaneseq
        %v1209 = vshrl.u32 %v1208, 7
        %v1210 = vsub.s32 %v1207, %v1209
        %v1211 = vrot.slane %v1197, %v1210
        %v1212 = vcombine.low %v1189, %v1204
        %v1213 = vcombine.high %v1189, %v1204
        %v1215 = vunpack.c.l.s4 1934713408
        %v1216 = vunpack.c.0.s8 %v1215
        %v1217 = vlaneseq
        %v1218 = vshrl.u32 %v1217, 7
        %v1219 = vsub.s32 %v1216, %v1218
        %v1220 = vrot.slane %v1212, %v1219
        %v1222 = vunpack.c.l.s4 1934713408
        %v1223 = vunpack.c.0.s8 %v1222
        %v1224 = vlaneseq
        %v1225 = vshrl.u32 %v1224, 7
        %v1226 = vsub.s32 %v1223, %v1225
        %v1227 = vrot.slane %v1213, %v1226
        %v1228 = vcombine.low %v1196, %v1211
        %v1229 = vcombine.high %v1196, %v1211
        %v1231 = vunpack.c.l.s4 1934713408
        %v1232 = vunpack.c.0.s8 %v1231
        %v1233 = vlaneseq
        %v1234 = vshrl.u32 %v1233, 7
        %v1235 = vsub.s32 %v1232, %v1234
        %v1236 = vrot.slane %v1228, %v1235
        %v1238 = vunpack.c.l.s4 1934713408
        %v1239 = vunpack.c.0.s8 %v1238
        %v1240 = vlaneseq
        %v1241 = vshrl.u32 %v1240, 7
        %v1242 = vsub.s32 %v1239, %v1241
        %v1243 = vrot.slane %v1229, %v1242
        %v1244 = vcombine.high %v1220, 0
        %v1245 = vcombine.high %v1227, 0
        %v1246 = vcombine.high %v1236, 0
        %v1247 = vcombine.high %v1243, 0
        %v1248 = vcombine.high %v1156, %v563
        %v1250 = vunpack.c.l.s4 1983009808
        %v1251 = vunpack.c.0.s8 %v1250
        %v1252 = vlaneseq
        %v1253 = vshrl.u32 %v1252, 7
        %v1254 = vsub.s32 %v1251, %v1253
        %v1255 = vrot.slane %v1156, %v1254
        %v1257 = vunpack.c.l.s4 1983009808
        %v1258 = vunpack.c.0.s8 %v1257
        %v1259 = vlaneseq
        %v1260 = vshrl.u32 %v1259, 7
        %v1261 = vsub.s32 %v1258, %v1260
        %v1262 = vrot.slane %v1248, %v1261
        %v1263 = vcombine.high %v1164, %v563
        %v1265 = vunpack.c.l.s4 1983009808
        %v1266 = vunpack.c.0.s8 %v1265
        %v1267 = vlaneseq
        %v1268 = vshrl.u32 %v1267, 7
        %v1269 = vsub.s32 %v1266, %v1268
        %v1270 = vrot.slane %v1164, %v1269
        %v1272 = vunpack.c.l.s4 1983009808
        %v1273 = vunpack.c.0.s8 %v1272
        %v1274 = vlaneseq
        %v1275 = vshrl.u32 %v1274, 7
        %v1276 = vsub.s32 %v1273, %v1275
        %v1277 = vrot.slane %v1263, %v1276
        %v1278 = vcombine.low %v1255, %v1270
        %v1279 = vcombine.high %v1255, %v1270
        %v1281 = vunpack.c.l.s4 1934713408
        %v1282 = vunpack.c.0.s8 %v1281
        %v1283 = vlaneseq
        %v1284 = vshrl.u32 %v1283, 7
        %v1285 = vsub.s32 %v1282, %v1284
        %v1286 = vrot.slane %v1278, %v1285
        %v1288 = vunpack.c.l.s4 1934713408
        %v1289 = vunpack.c.0.s8 %v1288
        %v1290 = vlaneseq
        %v1291 = vshrl.u32 %v1290, 7
        %v1292 = vsub.s32 %v1289, %v1291
        %v1293 = vrot.slane %v1279, %v1292
        %v1294 = vcombine.low %v1262, %v1277
        %v1295 = vcombine.high %v1262, %v1277
        %v1297 = vunpack.c.l.s4 1934713408
        %v1298 = vunpack.c.0.s8 %v1297
        %v1299 = vlaneseq
        %v1300 = vshrl.u32 %v1299, 7
        %v1301 = vsub.s32 %v1298, %v1300
        %v1302 = vrot.slane %v1294, %v1301
        %v1304 = vunpack.c.l.s4 1934713408
        %v1305 = vunpack.c.0.s8 %v1304
        %v1306 = vlaneseq
        %v1307 = vshrl.u32 %v1306, 7
        %v1308 = vsub.s32 %v1305, %v1307
        %v1309 = vrot.slane %v1295, %v1308
        %v1310 = vcombine.high %v1286, 0
        %v1311 = vcombine.high %v1293, 0
        %v1312 = vcombine.high %v1302, 0
        %v1313 = vcombine.high %v1309, 0
        %v1314 = vcombine.high %v1168, %v560
        %v1316 = vunpack.c.l.s4 1983009808
        %v1317 = vunpack.c.0.s8 %v1316
        %v1318 = vlaneseq
        %v1319 = vshrl.u32 %v1318, 7
        %v1320 = vsub.s32 %v1317, %v1319
        %v1321 = vrot.slane %v1168, %v1320
        %v1323 = vunpack.c.l.s4 1983009808
        %v1324 = vunpack.c.0.s8 %v1323
        %v1325 = vlaneseq
        %v1326 = vshrl.u32 %v1325, 7
        %v1327 = vsub.s32 %v1324, %v1326
        %v1328 = vrot.slane %v1314, %v1327
        %v1329 = vcombine.high %v1176, %v560
        %v1331 = vunpack.c.l.s4 1983009808
        %v1332 = vunpack.c.0.s8 %v1331
        %v1333 = vlaneseq
        %v1334 = vshrl.u32 %v1333, 7
        %v1335 = vsub.s32 %v1332, %v1334
        %v1336 = vrot.slane %v1176, %v1335
        %v1338 = vunpack.c.l.s4 1983009808
        %v1339 = vunpack.c.0.s8 %v1338
        %v1340 = vlaneseq
        %v1341 = vshrl.u32 %v1340, 7
        %v1342 = vsub.s32 %v1339, %v1341
        %v1343 = vrot.slane %v1329, %v1342
        %v1344 = vcombine.low %v1321, %v1336
        %v1345 = vcombine.high %v1321, %v1336
        %v1347 = vunpack.c.l.s4 1934713408
        %v1348 = vunpack.c.0.s8 %v1347
        %v1349 = vlaneseq
        %v1350 = vshrl.u32 %v1349, 7
        %v1351 = vsub.s32 %v1348, %v1350
        %v1352 = vrot.slane %v1344, %v1351
        %v1354 = vunpack.c.l.s4 1934713408
        %v1355 = vunpack.c.0.s8 %v1354
        %v1356 = vlaneseq
        %v1357 = vshrl.u32 %v1356, 7
        %v1358 = vsub.s32 %v1355, %v1357
        %v1359 = vrot.slane %v1345, %v1358
        %v1360 = vcombine.low %v1328, %v1343
        %v1361 = vcombine.high %v1328, %v1343
        %v1363 = vunpack.c.l.s4 1934713408
        %v1364 = vunpack.c.0.s8 %v1363
        %v1365 = vlaneseq
        %v1366 = vshrl.u32 %v1365, 7
        %v1367 = vsub.s32 %v1364, %v1366
        %v1368 = vrot.slane %v1360, %v1367
        %v1370 = vunpack.c.l.s4 1934713408
        %v1371 = vunpack.c.0.s8 %v1370
        %v1372 = vlaneseq
        %v1373 = vshrl.u32 %v1372, 7
        %v1374 = vsub.s32 %v1371, %v1373
        %v1375 = vrot.slane %v1361, %v1374
        %v1376 = vcombine.high %v1352, 0
        %v1377 = vcombine.high %v1359, 0
        %v1378 = vcombine.high %v1368, 0
        %v1379 = vcombine.high %v1375, 0
        %v1380 = vcombine.high %v1172, %v563
        %v1382 = vunpack.c.l.s4 1983009808
        %v1383 = vunpack.c.0.s8 %v1382
        %v1384 = vlaneseq
        %v1385 = vshrl.u32 %v1384, 7
        %v1386 = vsub.s32 %v1383, %v1385
        %v1387 = vrot.slane %v1172, %v1386
        %v1389 = vunpack.c.l.s4 1983009808
        %v1390 = vunpack.c.0.s8 %v1389
        %v1391 = vlaneseq
        %v1392 = vshrl.u32 %v1391, 7
        %v1393 = vsub.s32 %v1390, %v1392
        %v1394 = vrot.slane %v1380, %v1393
        %v1395 = vcombine.high %v1180, %v563
        %v1397 = vunpack.c.l.s4 1983009808
        %v1398 = vunpack.c.0.s8 %v1397
        %v1399 = vlaneseq
        %v1400 = vshrl.u32 %v1399, 7
        %v1401 = vsub.s32 %v1398, %v1400
        %v1402 = vrot.slane %v1180, %v1401
        %v1404 = vunpack.c.l.s4 1983009808
        %v1405 = vunpack.c.0.s8 %v1404
        %v1406 = vlaneseq
        %v1407 = vshrl.u32 %v1406, 7
        %v1408 = vsub.s32 %v1405, %v1407
        %v1409 = vrot.slane %v1395, %v1408
        %v1410 = vcombine.low %v1387, %v1402
        %v1411 = vcombine.high %v1387, %v1402
        %v1413 = vunpack.c.l.s4 1934713408
        %v1414 = vunpack.c.0.s8 %v1413
        %v1415 = vlaneseq
        %v1416 = vshrl.u32 %v1415, 7
        %v1417 = vsub.s32 %v1414, %v1416
        %v1418 = vrot.slane %v1410, %v1417
        %v1420 = vunpack.c.l.s4 1934713408
        %v1421 = vunpack.c.0.s8 %v1420
        %v1422 = vlaneseq
        %v1423 = vshrl.u32 %v1422, 7
        %v1424 = vsub.s32 %v1421, %v1423
        %v1425 = vrot.slane %v1411, %v1424
        %v1426 = vcombine.low %v1394, %v1409
        %v1427 = vcombine.high %v1394, %v1409
        %v1429 = vunpack.c.l.s4 1934713408
        %v1430 = vunpack.c.0.s8 %v1429
        %v1431 = vlaneseq
        %v1432 = vshrl.u32 %v1431, 7
        %v1433 = vsub.s32 %v1430, %v1432
        %v1434 = vrot.slane %v1426, %v1433
        %v1436 = vunpack.c.l.s4 1934713408
        %v1437 = vunpack.c.0.s8 %v1436
        %v1438 = vlaneseq
        %v1439 = vshrl.u32 %v1438, 7
        %v1440 = vsub.s32 %v1437, %v1439
        %v1441 = vrot.slane %v1427, %v1440
        %v1442 = vcombine.high %v1418, 0
        %v1443 = vcombine.high %v1425, 0
        %v1444 = vcombine.high %v1434, 0
        %v1445 = vcombine.high %v1441, 0
        %v1446 = vcombine.low %v1220, %v1227
        %v1448 = vunpack.c.l.s4 1983009808
        %v1449 = vunpack.c.0.s8 %v1448
        %v1450 = vlaneseq
        %v1451 = vshrl.u32 %v1450, 7
        %v1452 = vsub.s32 %v1449, %v1451
        %v1453 = vrot.slane %v1446, %v1452
        %v1454 = vcombine.low %v1244, %v1245
        %v1456 = vunpack.c.l.s4 1983009808
        %v1457 = vunpack.c.0.s8 %v1456
        %v1458 = vlaneseq
        %v1459 = vshrl.u32 %v1458, 7
        %v1460 = vsub.s32 %v1457, %v1459
        %v1461 = vrot.slane %v1454, %v1460
        %v1462 = vcombine.low %v1236, %v1243
        %v1464 = vunpack.c.l.s4 1983009808
        %v1465 = vunpack.c.0.s8 %v1464
        %v1466 = vlaneseq
        %v1467 = vshrl.u32 %v1466, 7
        %v1468 = vsub.s32 %v1465, %v1467
        %v1469 = vrot.slane %v1462, %v1468
        %v1470 = vcombine.low %v1246, %v1247
        %v1472 = vunpack.c.l.s4 1983009808
        %v1473 = vunpack.c.0.s8 %v1472
        %v1474 = vlaneseq
        %v1475 = vshrl.u32 %v1474, 7
        %v1476 = vsub.s32 %v1473, %v1475
        %v1477 = vrot.slane %v1470, %v1476
        %v1478 = vcombine.low %v1453, %v1461
        %v1480 = vunpack.c.l.s4 1934713408
        %v1481 = vunpack.c.0.s8 %v1480
        %v1482 = vlaneseq
        %v1483 = vshrl.u32 %v1482, 7
        %v1484 = vsub.s32 %v1481, %v1483
        %v1485 = vrot.slane %v1478, %v1484
        %v1486 = vcombine.low %v1469, %v1477
        %v1488 = vunpack.c.l.s4 1934713408
        %v1489 = vunpack.c.0.s8 %v1488
        %v1490 = vlaneseq
        %v1491 = vshrl.u32 %v1490, 7
        %v1492 = vsub.s32 %v1489, %v1491
        %v1493 = vrot.slane %v1486, %v1492
        %v1494 = vcombine.low %v1485, %v1493
        %v1495 = vcombine.high %v1485, %v1493
        %v1496 = vcombine.low %v1286, %v1293
        %v1498 = vunpack.c.l.s4 1983009808
        %v1499 = vunpack.c.0.s8 %v1498
        %v1500 = vlaneseq
        %v1501 = vshrl.u32 %v1500, 7
        %v1502 = vsub.s32 %v1499, %v1501
        %v1503 = vrot.slane %v1496, %v1502
        %v1504 = vcombine.low %v1310, %v1311
        %v1506 = vunpack.c.l.s4 1983009808
        %v1507 = vunpack.c.0.s8 %v1506
        %v1508 = vlaneseq
        %v1509 = vshrl.u32 %v1508, 7
        %v1510 = vsub.s32 %v1507, %v1509
        %v1511 = vrot.slane %v1504, %v1510
        %v1512 = vcombine.low %v1302, %v1309
        %v1514 = vunpack.c.l.s4 1983009808
        %v1515 = vunpack.c.0.s8 %v1514
        %v1516 = vlaneseq
        %v1517 = vshrl.u32 %v1516, 7
        %v1518 = vsub.s32 %v1515, %v1517
        %v1519 = vrot.slane %v1512, %v1518
        %v1520 = vcombine.low %v1312, %v1313
        %v1522 = vunpack.c.l.s4 1983009808
        %v1523 = vunpack.c.0.s8 %v1522
        %v1524 = vlaneseq
        %v1525 = vshrl.u32 %v1524, 7
        %v1526 = vsub.s32 %v1523, %v1525
        %v1527 = vrot.slane %v1520, %v1526
        %v1528 = vcombine.low %v1503, %v1511
        %v1530 = vunpack.c.l.s4 1934713408
        %v1531 = vunpack.c.0.s8 %v1530
        %v1532 = vlaneseq
        %v1533 = vshrl.u32 %v1532, 7
        %v1534 = vsub.s32 %v1531, %v1533
        %v1535 = vrot.slane %v1528, %v1534
        %v1536 = vcombine.low %v1519, %v1527
        %v1538 = vunpack.c.l.s4 1934713408
        %v1539 = vunpack.c.0.s8 %v1538
        %v1540 = vlaneseq
        %v1541 = vshrl.u32 %v1540, 7
        %v1542 = vsub.s32 %v1539, %v1541
        %v1543 = vrot.slane %v1536, %v1542
        %v1544 = vcombine.low %v1535, %v1543
        %v1545 = vcombine.high %v1535, %v1543
        %v1546 = vcombine.low %v1352, %v1359
        %v1548 = vunpack.c.l.s4 1983009808
        %v1549 = vunpack.c.0.s8 %v1548
        %v1550 = vlaneseq
        %v1551 = vshrl.u32 %v1550, 7
        %v1552 = vsub.s32 %v1549, %v1551
        %v1553 = vrot.slane %v1546, %v1552
        %v1554 = vcombine.low %v1376, %v1377
        %v1556 = vunpack.c.l.s4 1983009808
        %v1557 = vunpack.c.0.s8 %v1556
        %v1558 = vlaneseq
        %v1559 = vshrl.u32 %v1558, 7
        %v1560 = vsub.s32 %v1557, %v1559
        %v1561 = vrot.slane %v1554, %v1560
        %v1562 = vcombine.low %v1368, %v1375
        %v1564 = vunpack.c.l.s4 1983009808
        %v1565 = vunpack.c.0.s8 %v1564
        %v1566 = vlaneseq
        %v1567 = vshrl.u32 %v1566, 7
        %v1568 = vsub.s32 %v1565, %v1567
        %v1569 = vrot.slane %v1562, %v1568
        %v1570 = vcombine.low %v1378, %v1379
        %v1572 = vunpack.c.l.s4 1983009808
        %v1573 = vunpack.c.0.s8 %v1572
        %v1574 = vlaneseq
        %v1575 = vshrl.u32 %v1574, 7
        %v1576 = vsub.s32 %v1573, %v1575
        %v1577 = vrot.slane %v1570, %v1576
        %v1578 = vcombine.low %v1553, %v1561
        %v1580 = vunpack.c.l.s4 1934713408
        %v1581 = vunpack.c.0.s8 %v1580
        %v1582 = vlaneseq
        %v1583 = vshrl.u32 %v1582, 7
        %v1584 = vsub.s32 %v1581, %v1583
        %v1585 = vrot.slane %v1578, %v1584
        %v1586 = vcombine.low %v1569, %v1577
        %v1588 = vunpack.c.l.s4 1934713408
        %v1589 = vunpack.c.0.s8 %v1588
        %v1590 = vlaneseq
        %v1591 = vshrl.u32 %v1590, 7
        %v1592 = vsub.s32 %v1589, %v1591
        %v1593 = vrot.slane %v1586, %v1592
        %v1594 = vcombine.low %v1585, %v1593
        %v1595 = vcombine.high %v1585, %v1593
        %v1596 = vcombine.low %v1418, %v1425
        %v1598 = vunpack.c.l.s4 1983009808
        %v1599 = vunpack.c.0.s8 %v1598
        %v1600 = vlaneseq
        %v1601 = vshrl.u32 %v1600, 7
        %v1602 = vsub.s32 %v1599, %v1601
        %v1603 = vrot.slane %v1596, %v1602
        %v1604 = vcombine.low %v1442, %v1443
        %v1606 = vunpack.c.l.s4 1983009808
        %v1607 = vunpack.c.0.s8 %v1606
        %v1608 = vlaneseq
        %v1609 = vshrl.u32 %v1608, 7
        %v1610 = vsub.s32 %v1607, %v1609
        %v1611 = vrot.slane %v1604, %v1610
        %v1612 = vcombine.low %v1434, %v1441
        %v1614 = vunpack.c.l.s4 1983009808
        %v1615 = vunpack.c.0.s8 %v1614
        %v1616 = vlaneseq
        %v1617 = vshrl.u32 %v1616, 7
        %v1618 = vsub.s32 %v1615, %v1617
        %v1619 = vrot.slane %v1612, %v1618
        %v1620 = vcombine.low %v1444, %v1445
        %v1622 = vunpack.c.l.s4 1983009808
        %v1623 = vunpack.c.0.s8 %v1622
        %v1624 = vlaneseq
        %v1625 = vshrl.u32 %v1624, 7
        %v1626 = vsub.s32 %v1623, %v1625
        %v1627 = vrot.slane %v1620, %v1626
        %v1628 = vcombine.low %v1603, %v1611
        %v1630 = vunpack.c.l.s4 1934713408
        %v1631 = vunpack.c.0.s8 %v1630
        %v1632 = vlaneseq
        %v1633 = vshrl.u32 %v1632, 7
        %v1634 = vsub.s32 %v1631, %v1633
        %v1635 = vrot.slane %v1628, %v1634
        %v1636 = vcombine.low %v1619, %v1627
        %v1638 = vunpack.c.l.s4 1934713408
        %v1639 = vunpack.c.0.s8 %v1638
        %v1640 = vlaneseq
        %v1641 = vshrl.u32 %v1640, 7
        %v1642 = vsub.s32 %v1639, %v1641
        %v1643 = vrot.slane %v1636, %v1642
        %v1644 = vcombine.low %v1635, %v1643
        %v1645 = vcombine.high %v1635, %v1643
        %v1648 = vpack.i.b16 %v1544, %v1494
        %v1649 = vshrl.u32 %v1494, 16
        %v1650 = vshrl.u32 %v1544, 16
        %v1651 = vpack.i.b16 %v1650, %v1649
        %v1654 = vpack.i.b16 %v1545, %v1495
        %v1655 = vshrl.u32 %v1495, 16
        %v1656 = vshrl.u32 %v1545, 16
        %v1657 = vpack.i.b16 %v1656, %v1655
        %v1660 = vpack.i.b16 %v1644, %v1594
        %v1661 = vshrl.u32 %v1594, 16
        %v1662 = vshrl.u32 %v1644, 16
        %v1663 = vpack.i.b16 %v1662, %v1661
        %v1666 = vpack.i.b16 %v1645, %v1595
        %v1667 = vshrl.u32 %v1595, 16
        %v1668 = vshrl.u32 %v1645, 16
        %v1669 = vpack.i.b16 %v1668, %v1667
        %v1670 = vunpack.c.l.b16 %v1648
        %v1671 = vunpack.c.h.b16 %v1648
        %v1672 = vunpack.c.l.b16 %v1660
        %v1673 = vunpack.c.h.b16 %v1660
        %v1674 = vunpack.c.l.b16 %v1651
        %v1675 = vunpack.c.h.b16 %v1651
        %v1676 = vunpack.c.l.b16 %v1663
        %v1677 = vunpack.c.h.b16 %v1663
        %v1678 = vunpack.c.l.b16 %v1654
        %v1679 = vunpack.c.h.b16 %v1654
        %v1680 = vunpack.c.l.b16 %v1666
        %v1681 = vunpack.c.h.b16 %v1666
        %v1682 = vunpack.c.l.b16 %v1657
        %v1683 = vunpack.c.h.b16 %v1657
        %v1684 = vunpack.c.l.b16 %v1669
        %v1685 = vunpack.c.h.b16 %v1669
        %v1686 = vpack.c.b16 %v1670, %v1670
        %v1687 = vpack.c.b16 %v1671, %v1671
        %v1688 = vpack.c.b16 %v1672, %v1672
        %v1689 = vpack.c.b16 %v1673, %v1673
        %v1690 = vpack.c.b16 %v1674, %v1674
        %v1691 = vpack.c.b16 %v1675, %v1675
        %v1692 = vpack.c.b16 %v1676, %v1676
        %v1693 = vpack.c.b16 %v1677, %v1677
        %v1694 = vpack.c.b16 %v1678, %v1678
        %v1695 = vpack.c.b16 %v1679, %v1679
        %v1696 = vpack.c.b16 %v1680, %v1680
        %v1697 = vpack.c.b16 %v1681, %v1681
        %v1698 = vpack.c.b16 %v1682, %v1682
        %v1699 = vpack.c.b16 %v1683, %v1683
        %v1700 = vpack.c.b16 %v1684, %v1684
        %v1701 = vpack.c.b16 %v1685, %v1685
        %1718 = vst.msk [vmem:[%s303] sm:$0xf] %vm1117, %v1686
        %1719 = vst.msk [vmem:[%s303 + $0x4] sm:$0xf] %vm1117, %v1687
        %1720 = vst.msk [vmem:[%s303 + $0x8] sm:$0xf] %vm1117, %v1688
        %1721 = vst.msk [vmem:[%s303 + $0xc] sm:$0xf] %vm1117, %v1689
        %1722 = vst.msk [vmem:[%s303 + $0x10] sm:$0xf] %vm1117, %v1690
        %1723 = vst.msk [vmem:[%s303 + $0x14] sm:$0xf] %vm1117, %v1691
        %1724 = vst.msk [vmem:[%s303 + $0x18] sm:$0xf] %vm1117, %v1692
        %1725 = vst.msk [vmem:[%s303 + $0x1c] sm:$0xf] %vm1117, %v1693
        %1726 = vst.msk [vmem:[%s303 + $0x20] sm:$0xf] %vm1117, %v1694
        %1727 = vst.msk [vmem:[%s303 + $0x24] sm:$0xf] %vm1117, %v1695
        %1728 = vst.msk [vmem:[%s303 + $0x28] sm:$0xf] %vm1117, %v1696
        %1729 = vst.msk [vmem:[%s303 + $0x2c] sm:$0xf] %vm1117, %v1697
        %1730 = vst.msk [vmem:[%s303 + $0x30] sm:$0xf] %vm1117, %v1698
        %1731 = vst.msk [vmem:[%s303 + $0x34] sm:$0xf] %vm1117, %v1699
        %1732 = vst.msk [vmem:[%s303 + $0x38] sm:$0xf] %vm1117, %v1700
        %1733 = vst.msk [vmem:[%s303 + $0x3c] sm:$0xf] %vm1117, %v1701
        %1736 = vrot.lane.b32.xlu0 %v526, 112
        %v1737 = vpop.permute.xlu0 %1736
        %1738 = vrot.lane.b32.xlu0 %v528, 112
        %v1739 = vpop.permute.xlu0 %1738
        %1740 = vrot.lane.b32.xlu0 %v526, 96
        %v1741 = vpop.permute.xlu0 %1740
        %1742 = vrot.lane.b32.xlu0 %v528, 96
        %v1743 = vpop.permute.xlu0 %1742
        %1744 = vrot.lane.b32.xlu0 %v526, 80
        %v1745 = vpop.permute.xlu0 %1744
        %1746 = vrot.lane.b32.xlu0 %v528, 80
        %v1747 = vpop.permute.xlu0 %1746
        %v1750 = vpack.i.b16 %v1737, %v526
        %v1752 = vshrl.u32 %v526, 16
        %v1753 = vshrl.u32 %v1737, 16
        %v1754 = vpack.i.b16 %v1753, %v1752
        %v1758 = vpack.i.b16 %v1745, %v1741
        %v1760 = vshrl.u32 %v1741, 16
        %v1761 = vshrl.u32 %v1745, 16
        %v1762 = vpack.i.b16 %v1761, %v1760
        %v1766 = vpack.i.b16 %v1739, %v528
        %v1768 = vshrl.u32 %v528, 16
        %v1769 = vshrl.u32 %v1739, 16
        %v1770 = vpack.i.b16 %v1769, %v1768
        %v1774 = vpack.i.b16 %v1747, %v1743
        %v1776 = vshrl.u32 %v1743, 16
        %v1777 = vshrl.u32 %v1747, 16
        %v1778 = vpack.i.b16 %v1777, %v1776
        %v1780 = vcombine.high %v1750, %v560
        %v1782 = vunpack.c.l.s4 1983009808
        %v1783 = vunpack.c.0.s8 %v1782
        %v1784 = vlaneseq
        %v1785 = vshrl.u32 %v1784, 7
        %v1786 = vsub.s32 %v1783, %v1785
        %v1787 = vrot.slane %v1750, %v1786
        %v1789 = vunpack.c.l.s4 1983009808
        %v1790 = vunpack.c.0.s8 %v1789
        %v1791 = vlaneseq
        %v1792 = vshrl.u32 %v1791, 7
        %v1793 = vsub.s32 %v1790, %v1792
        %v1794 = vrot.slane %v1780, %v1793
        %v1795 = vcombine.high %v1758, %v560
        %v1797 = vunpack.c.l.s4 1983009808
        %v1798 = vunpack.c.0.s8 %v1797
        %v1799 = vlaneseq
        %v1800 = vshrl.u32 %v1799, 7
        %v1801 = vsub.s32 %v1798, %v1800
        %v1802 = vrot.slane %v1758, %v1801
        %v1804 = vunpack.c.l.s4 1983009808
        %v1805 = vunpack.c.0.s8 %v1804
        %v1806 = vlaneseq
        %v1807 = vshrl.u32 %v1806, 7
        %v1808 = vsub.s32 %v1805, %v1807
        %v1809 = vrot.slane %v1795, %v1808
        %v1810 = vcombine.low %v1787, %v1802
        %v1811 = vcombine.high %v1787, %v1802
        %v1813 = vunpack.c.l.s4 1934713408
        %v1814 = vunpack.c.0.s8 %v1813
        %v1815 = vlaneseq
        %v1816 = vshrl.u32 %v1815, 7
        %v1817 = vsub.s32 %v1814, %v1816
        %v1818 = vrot.slane %v1810, %v1817
        %v1820 = vunpack.c.l.s4 1934713408
        %v1821 = vunpack.c.0.s8 %v1820
        %v1822 = vlaneseq
        %v1823 = vshrl.u32 %v1822, 7
        %v1824 = vsub.s32 %v1821, %v1823
        %v1825 = vrot.slane %v1811, %v1824
        %v1826 = vcombine.low %v1794, %v1809
        %v1827 = vcombine.high %v1794, %v1809
        %v1829 = vunpack.c.l.s4 1934713408
        %v1830 = vunpack.c.0.s8 %v1829
        %v1831 = vlaneseq
        %v1832 = vshrl.u32 %v1831, 7
        %v1833 = vsub.s32 %v1830, %v1832
        %v1834 = vrot.slane %v1826, %v1833
        %v1836 = vunpack.c.l.s4 1934713408
        %v1837 = vunpack.c.0.s8 %v1836
        %v1838 = vlaneseq
        %v1839 = vshrl.u32 %v1838, 7
        %v1840 = vsub.s32 %v1837, %v1839
        %v1841 = vrot.slane %v1827, %v1840
        %v1842 = vcombine.high %v1818, 0
        %v1843 = vcombine.high %v1825, 0
        %v1844 = vcombine.high %v1834, 0
        %v1845 = vcombine.high %v1841, 0
        %v1846 = vcombine.high %v1754, %v563
        %v1848 = vunpack.c.l.s4 1983009808
        %v1849 = vunpack.c.0.s8 %v1848
        %v1850 = vlaneseq
        %v1851 = vshrl.u32 %v1850, 7
        %v1852 = vsub.s32 %v1849, %v1851
        %v1853 = vrot.slane %v1754, %v1852
        %v1855 = vunpack.c.l.s4 1983009808
        %v1856 = vunpack.c.0.s8 %v1855
        %v1857 = vlaneseq
        %v1858 = vshrl.u32 %v1857, 7
        %v1859 = vsub.s32 %v1856, %v1858
        %v1860 = vrot.slane %v1846, %v1859
        %v1861 = vcombine.high %v1762, %v563
        %v1863 = vunpack.c.l.s4 1983009808
        %v1864 = vunpack.c.0.s8 %v1863
        %v1865 = vlaneseq
        %v1866 = vshrl.u32 %v1865, 7
        %v1867 = vsub.s32 %v1864, %v1866
        %v1868 = vrot.slane %v1762, %v1867
        %v1870 = vunpack.c.l.s4 1983009808
        %v1871 = vunpack.c.0.s8 %v1870
        %v1872 = vlaneseq
        %v1873 = vshrl.u32 %v1872, 7
        %v1874 = vsub.s32 %v1871, %v1873
        %v1875 = vrot.slane %v1861, %v1874
        %v1876 = vcombine.low %v1853, %v1868
        %v1877 = vcombine.high %v1853, %v1868
        %v1879 = vunpack.c.l.s4 1934713408
        %v1880 = vunpack.c.0.s8 %v1879
        %v1881 = vlaneseq
        %v1882 = vshrl.u32 %v1881, 7
        %v1883 = vsub.s32 %v1880, %v1882
        %v1884 = vrot.slane %v1876, %v1883
        %v1886 = vunpack.c.l.s4 1934713408
        %v1887 = vunpack.c.0.s8 %v1886
        %v1888 = vlaneseq
        %v1889 = vshrl.u32 %v1888, 7
        %v1890 = vsub.s32 %v1887, %v1889
        %v1891 = vrot.slane %v1877, %v1890
        %v1892 = vcombine.low %v1860, %v1875
        %v1893 = vcombine.high %v1860, %v1875
        %v1895 = vunpack.c.l.s4 1934713408
        %v1896 = vunpack.c.0.s8 %v1895
        %v1897 = vlaneseq
        %v1898 = vshrl.u32 %v1897, 7
        %v1899 = vsub.s32 %v1896, %v1898
        %v1900 = vrot.slane %v1892, %v1899
        %v1902 = vunpack.c.l.s4 1934713408
        %v1903 = vunpack.c.0.s8 %v1902
        %v1904 = vlaneseq
        %v1905 = vshrl.u32 %v1904, 7
        %v1906 = vsub.s32 %v1903, %v1905
        %v1907 = vrot.slane %v1893, %v1906
        %v1908 = vcombine.high %v1884, 0
        %v1909 = vcombine.high %v1891, 0
        %v1910 = vcombine.high %v1900, 0
        %v1911 = vcombine.high %v1907, 0
        %v1912 = vcombine.high %v1766, %v560
        %v1914 = vunpack.c.l.s4 1983009808
        %v1915 = vunpack.c.0.s8 %v1914
        %v1916 = vlaneseq
        %v1917 = vshrl.u32 %v1916, 7
        %v1918 = vsub.s32 %v1915, %v1917
        %v1919 = vrot.slane %v1766, %v1918
        %v1921 = vunpack.c.l.s4 1983009808
        %v1922 = vunpack.c.0.s8 %v1921
        %v1923 = vlaneseq
        %v1924 = vshrl.u32 %v1923, 7
        %v1925 = vsub.s32 %v1922, %v1924
        %v1926 = vrot.slane %v1912, %v1925
        %v1927 = vcombine.high %v1774, %v560
        %v1929 = vunpack.c.l.s4 1983009808
        %v1930 = vunpack.c.0.s8 %v1929
        %v1931 = vlaneseq
        %v1932 = vshrl.u32 %v1931, 7
        %v1933 = vsub.s32 %v1930, %v1932
        %v1934 = vrot.slane %v1774, %v1933
        %v1936 = vunpack.c.l.s4 1983009808
        %v1937 = vunpack.c.0.s8 %v1936
        %v1938 = vlaneseq
        %v1939 = vshrl.u32 %v1938, 7
        %v1940 = vsub.s32 %v1937, %v1939
        %v1941 = vrot.slane %v1927, %v1940
        %v1942 = vcombine.low %v1919, %v1934
        %v1943 = vcombine.high %v1919, %v1934
        %v1945 = vunpack.c.l.s4 1934713408
        %v1946 = vunpack.c.0.s8 %v1945
        %v1947 = vlaneseq
        %v1948 = vshrl.u32 %v1947, 7
        %v1949 = vsub.s32 %v1946, %v1948
        %v1950 = vrot.slane %v1942, %v1949
        %v1952 = vunpack.c.l.s4 1934713408
        %v1953 = vunpack.c.0.s8 %v1952
        %v1954 = vlaneseq
        %v1955 = vshrl.u32 %v1954, 7
        %v1956 = vsub.s32 %v1953, %v1955
        %v1957 = vrot.slane %v1943, %v1956
        %v1958 = vcombine.low %v1926, %v1941
        %v1959 = vcombine.high %v1926, %v1941
        %v1961 = vunpack.c.l.s4 1934713408
        %v1962 = vunpack.c.0.s8 %v1961
        %v1963 = vlaneseq
        %v1964 = vshrl.u32 %v1963, 7
        %v1965 = vsub.s32 %v1962, %v1964
        %v1966 = vrot.slane %v1958, %v1965
        %v1968 = vunpack.c.l.s4 1934713408
        %v1969 = vunpack.c.0.s8 %v1968
        %v1970 = vlaneseq
        %v1971 = vshrl.u32 %v1970, 7
        %v1972 = vsub.s32 %v1969, %v1971
        %v1973 = vrot.slane %v1959, %v1972
        %v1974 = vcombine.high %v1950, 0
        %v1975 = vcombine.high %v1957, 0
        %v1976 = vcombine.high %v1966, 0
        %v1977 = vcombine.high %v1973, 0
        %v1978 = vcombine.high %v1770, %v563
        %v1980 = vunpack.c.l.s4 1983009808
        %v1981 = vunpack.c.0.s8 %v1980
        %v1982 = vlaneseq
        %v1983 = vshrl.u32 %v1982, 7
        %v1984 = vsub.s32 %v1981, %v1983
        %v1985 = vrot.slane %v1770, %v1984
        %v1987 = vunpack.c.l.s4 1983009808
        %v1988 = vunpack.c.0.s8 %v1987
        %v1989 = vlaneseq
        %v1990 = vshrl.u32 %v1989, 7
        %v1991 = vsub.s32 %v1988, %v1990
        %v1992 = vrot.slane %v1978, %v1991
        %v1993 = vcombine.high %v1778, %v563
        %v1995 = vunpack.c.l.s4 1983009808
        %v1996 = vunpack.c.0.s8 %v1995
        %v1997 = vlaneseq
        %v1998 = vshrl.u32 %v1997, 7
        %v1999 = vsub.s32 %v1996, %v1998
        %v2000 = vrot.slane %v1778, %v1999
        %v2002 = vunpack.c.l.s4 1983009808
        %v2003 = vunpack.c.0.s8 %v2002
        %v2004 = vlaneseq
        %v2005 = vshrl.u32 %v2004, 7
        %v2006 = vsub.s32 %v2003, %v2005
        %v2007 = vrot.slane %v1993, %v2006
        %v2008 = vcombine.low %v1985, %v2000
        %v2009 = vcombine.high %v1985, %v2000
        %v2011 = vunpack.c.l.s4 1934713408
        %v2012 = vunpack.c.0.s8 %v2011
        %v2013 = vlaneseq
        %v2014 = vshrl.u32 %v2013, 7
        %v2015 = vsub.s32 %v2012, %v2014
        %v2016 = vrot.slane %v2008, %v2015
        %v2018 = vunpack.c.l.s4 1934713408
        %v2019 = vunpack.c.0.s8 %v2018
        %v2020 = vlaneseq
        %v2021 = vshrl.u32 %v2020, 7
        %v2022 = vsub.s32 %v2019, %v2021
        %v2023 = vrot.slane %v2009, %v2022
        %v2024 = vcombine.low %v1992, %v2007
        %v2025 = vcombine.high %v1992, %v2007
        %v2027 = vunpack.c.l.s4 1934713408
        %v2028 = vunpack.c.0.s8 %v2027
        %v2029 = vlaneseq
        %v2030 = vshrl.u32 %v2029, 7
        %v2031 = vsub.s32 %v2028, %v2030
        %v2032 = vrot.slane %v2024, %v2031
        %v2034 = vunpack.c.l.s4 1934713408
        %v2035 = vunpack.c.0.s8 %v2034
        %v2036 = vlaneseq
        %v2037 = vshrl.u32 %v2036, 7
        %v2038 = vsub.s32 %v2035, %v2037
        %v2039 = vrot.slane %v2025, %v2038
        %v2040 = vcombine.high %v2016, 0
        %v2041 = vcombine.high %v2023, 0
        %v2042 = vcombine.high %v2032, 0
        %v2043 = vcombine.high %v2039, 0
        %v2044 = vcombine.low %v1818, %v1825
        %v2046 = vunpack.c.l.s4 1983009808
        %v2047 = vunpack.c.0.s8 %v2046
        %v2048 = vlaneseq
        %v2049 = vshrl.u32 %v2048, 7
        %v2050 = vsub.s32 %v2047, %v2049
        %v2051 = vrot.slane %v2044, %v2050
        %v2052 = vcombine.low %v1842, %v1843
        %v2054 = vunpack.c.l.s4 1983009808
        %v2055 = vunpack.c.0.s8 %v2054
        %v2056 = vlaneseq
        %v2057 = vshrl.u32 %v2056, 7
        %v2058 = vsub.s32 %v2055, %v2057
        %v2059 = vrot.slane %v2052, %v2058
        %v2060 = vcombine.low %v1834, %v1841
        %v2062 = vunpack.c.l.s4 1983009808
        %v2063 = vunpack.c.0.s8 %v2062
        %v2064 = vlaneseq
        %v2065 = vshrl.u32 %v2064, 7
        %v2066 = vsub.s32 %v2063, %v2065
        %v2067 = vrot.slane %v2060, %v2066
        %v2068 = vcombine.low %v1844, %v1845
        %v2070 = vunpack.c.l.s4 1983009808
        %v2071 = vunpack.c.0.s8 %v2070
        %v2072 = vlaneseq
        %v2073 = vshrl.u32 %v2072, 7
        %v2074 = vsub.s32 %v2071, %v2073
        %v2075 = vrot.slane %v2068, %v2074
        %v2076 = vcombine.low %v2051, %v2059
        %v2078 = vunpack.c.l.s4 1934713408
        %v2079 = vunpack.c.0.s8 %v2078
        %v2080 = vlaneseq
        %v2081 = vshrl.u32 %v2080, 7
        %v2082 = vsub.s32 %v2079, %v2081
        %v2083 = vrot.slane %v2076, %v2082
        %v2084 = vcombine.low %v2067, %v2075
        %v2086 = vunpack.c.l.s4 1934713408
        %v2087 = vunpack.c.0.s8 %v2086
        %v2088 = vlaneseq
        %v2089 = vshrl.u32 %v2088, 7
        %v2090 = vsub.s32 %v2087, %v2089
        %v2091 = vrot.slane %v2084, %v2090
        %v2092 = vcombine.low %v2083, %v2091
        %v2093 = vcombine.high %v2083, %v2091
        %v2094 = vcombine.low %v1884, %v1891
        %v2096 = vunpack.c.l.s4 1983009808
        %v2097 = vunpack.c.0.s8 %v2096
        %v2098 = vlaneseq
        %v2099 = vshrl.u32 %v2098, 7
        %v2100 = vsub.s32 %v2097, %v2099
        %v2101 = vrot.slane %v2094, %v2100
        %v2102 = vcombine.low %v1908, %v1909
        %v2104 = vunpack.c.l.s4 1983009808
        %v2105 = vunpack.c.0.s8 %v2104
        %v2106 = vlaneseq
        %v2107 = vshrl.u32 %v2106, 7
        %v2108 = vsub.s32 %v2105, %v2107
        %v2109 = vrot.slane %v2102, %v2108
        %v2110 = vcombine.low %v1900, %v1907
        %v2112 = vunpack.c.l.s4 1983009808
        %v2113 = vunpack.c.0.s8 %v2112
        %v2114 = vlaneseq
        %v2115 = vshrl.u32 %v2114, 7
        %v2116 = vsub.s32 %v2113, %v2115
        %v2117 = vrot.slane %v2110, %v2116
        %v2118 = vcombine.low %v1910, %v1911
        %v2120 = vunpack.c.l.s4 1983009808
        %v2121 = vunpack.c.0.s8 %v2120
        %v2122 = vlaneseq
        %v2123 = vshrl.u32 %v2122, 7
        %v2124 = vsub.s32 %v2121, %v2123
        %v2125 = vrot.slane %v2118, %v2124
        %v2126 = vcombine.low %v2101, %v2109
        %v2128 = vunpack.c.l.s4 1934713408
        %v2129 = vunpack.c.0.s8 %v2128
        %v2130 = vlaneseq
        %v2131 = vshrl.u32 %v2130, 7
        %v2132 = vsub.s32 %v2129, %v2131
        %v2133 = vrot.slane %v2126, %v2132
        %v2134 = vcombine.low %v2117, %v2125
        %v2136 = vunpack.c.l.s4 1934713408
        %v2137 = vunpack.c.0.s8 %v2136
        %v2138 = vlaneseq
        %v2139 = vshrl.u32 %v2138, 7
        %v2140 = vsub.s32 %v2137, %v2139
        %v2141 = vrot.slane %v2134, %v2140
        %v2142 = vcombine.low %v2133, %v2141
        %v2143 = vcombine.high %v2133, %v2141
        %v2144 = vcombine.low %v1950, %v1957
        %v2146 = vunpack.c.l.s4 1983009808
        %v2147 = vunpack.c.0.s8 %v2146
        %v2148 = vlaneseq
        %v2149 = vshrl.u32 %v2148, 7
        %v2150 = vsub.s32 %v2147, %v2149
        %v2151 = vrot.slane %v2144, %v2150
        %v2152 = vcombine.low %v1974, %v1975
        %v2154 = vunpack.c.l.s4 1983009808
        %v2155 = vunpack.c.0.s8 %v2154
        %v2156 = vlaneseq
        %v2157 = vshrl.u32 %v2156, 7
        %v2158 = vsub.s32 %v2155, %v2157
        %v2159 = vrot.slane %v2152, %v2158
        %v2160 = vcombine.low %v1966, %v1973
        %v2162 = vunpack.c.l.s4 1983009808
        %v2163 = vunpack.c.0.s8 %v2162
        %v2164 = vlaneseq
        %v2165 = vshrl.u32 %v2164, 7
        %v2166 = vsub.s32 %v2163, %v2165
        %v2167 = vrot.slane %v2160, %v2166
        %v2168 = vcombine.low %v1976, %v1977
        %v2170 = vunpack.c.l.s4 1983009808
        %v2171 = vunpack.c.0.s8 %v2170
        %v2172 = vlaneseq
        %v2173 = vshrl.u32 %v2172, 7
        %v2174 = vsub.s32 %v2171, %v2173
        %v2175 = vrot.slane %v2168, %v2174
        %v2176 = vcombine.low %v2151, %v2159
        %v2178 = vunpack.c.l.s4 1934713408
        %v2179 = vunpack.c.0.s8 %v2178
        %v2180 = vlaneseq
        %v2181 = vshrl.u32 %v2180, 7
        %v2182 = vsub.s32 %v2179, %v2181
        %v2183 = vrot.slane %v2176, %v2182
        %v2184 = vcombine.low %v2167, %v2175
        %v2186 = vunpack.c.l.s4 1934713408
        %v2187 = vunpack.c.0.s8 %v2186
        %v2188 = vlaneseq
        %v2189 = vshrl.u32 %v2188, 7
        %v2190 = vsub.s32 %v2187, %v2189
        %v2191 = vrot.slane %v2184, %v2190
        %v2192 = vcombine.low %v2183, %v2191
        %v2193 = vcombine.high %v2183, %v2191
        %v2194 = vcombine.low %v2016, %v2023
        %v2196 = vunpack.c.l.s4 1983009808
        %v2197 = vunpack.c.0.s8 %v2196
        %v2198 = vlaneseq
        %v2199 = vshrl.u32 %v2198, 7
        %v2200 = vsub.s32 %v2197, %v2199
        %v2201 = vrot.slane %v2194, %v2200
        %v2202 = vcombine.low %v2040, %v2041
        %v2204 = vunpack.c.l.s4 1983009808
        %v2205 = vunpack.c.0.s8 %v2204
        %v2206 = vlaneseq
        %v2207 = vshrl.u32 %v2206, 7
        %v2208 = vsub.s32 %v2205, %v2207
        %v2209 = vrot.slane %v2202, %v2208
        %v2210 = vcombine.low %v2032, %v2039
        %v2212 = vunpack.c.l.s4 1983009808
        %v2213 = vunpack.c.0.s8 %v2212
        %v2214 = vlaneseq
        %v2215 = vshrl.u32 %v2214, 7
        %v2216 = vsub.s32 %v2213, %v2215
        %v2217 = vrot.slane %v2210, %v2216
        %v2218 = vcombine.low %v2042, %v2043
        %v2220 = vunpack.c.l.s4 1983009808
        %v2221 = vunpack.c.0.s8 %v2220
        %v2222 = vlaneseq
        %v2223 = vshrl.u32 %v2222, 7
        %v2224 = vsub.s32 %v2221, %v2223
        %v2225 = vrot.slane %v2218, %v2224
        %v2226 = vcombine.low %v2201, %v2209
        %v2228 = vunpack.c.l.s4 1934713408
        %v2229 = vunpack.c.0.s8 %v2228
        %v2230 = vlaneseq
        %v2231 = vshrl.u32 %v2230, 7
        %v2232 = vsub.s32 %v2229, %v2231
        %v2233 = vrot.slane %v2226, %v2232
        %v2234 = vcombine.low %v2217, %v2225
        %v2236 = vunpack.c.l.s4 1934713408
        %v2237 = vunpack.c.0.s8 %v2236
        %v2238 = vlaneseq
        %v2239 = vshrl.u32 %v2238, 7
        %v2240 = vsub.s32 %v2237, %v2239
        %v2241 = vrot.slane %v2234, %v2240
        %v2242 = vcombine.low %v2233, %v2241
        %v2243 = vcombine.high %v2233, %v2241
        %v2246 = vpack.i.b16 %v2142, %v2092
        %v2247 = vshrl.u32 %v2092, 16
        %v2248 = vshrl.u32 %v2142, 16
        %v2249 = vpack.i.b16 %v2248, %v2247
        %v2252 = vpack.i.b16 %v2143, %v2093
        %v2253 = vshrl.u32 %v2093, 16
        %v2254 = vshrl.u32 %v2143, 16
        %v2255 = vpack.i.b16 %v2254, %v2253
        %v2258 = vpack.i.b16 %v2242, %v2192
        %v2259 = vshrl.u32 %v2192, 16
        %v2260 = vshrl.u32 %v2242, 16
        %v2261 = vpack.i.b16 %v2260, %v2259
        %v2264 = vpack.i.b16 %v2243, %v2193
        %v2265 = vshrl.u32 %v2193, 16
        %v2266 = vshrl.u32 %v2243, 16
        %v2267 = vpack.i.b16 %v2266, %v2265
        %v2268 = vunpack.c.l.b16 %v2246
        %v2269 = vunpack.c.h.b16 %v2246
        %v2270 = vunpack.c.l.b16 %v2258
        %v2271 = vunpack.c.h.b16 %v2258
        %v2272 = vunpack.c.l.b16 %v2249
        %v2273 = vunpack.c.h.b16 %v2249
        %v2274 = vunpack.c.l.b16 %v2261
        %v2275 = vunpack.c.h.b16 %v2261
        %v2276 = vunpack.c.l.b16 %v2252
        %v2277 = vunpack.c.h.b16 %v2252
        %v2278 = vunpack.c.l.b16 %v2264
        %v2279 = vunpack.c.h.b16 %v2264
        %v2280 = vunpack.c.l.b16 %v2255
        %v2281 = vunpack.c.h.b16 %v2255
        %v2282 = vunpack.c.l.b16 %v2267
        %v2283 = vunpack.c.h.b16 %v2267
        %v2284 = vpack.c.b16 %v2268, %v2268
        %v2285 = vpack.c.b16 %v2269, %v2269
        %v2286 = vpack.c.b16 %v2270, %v2270
        %v2287 = vpack.c.b16 %v2271, %v2271
        %v2288 = vpack.c.b16 %v2272, %v2272
        %v2289 = vpack.c.b16 %v2273, %v2273
        %v2290 = vpack.c.b16 %v2274, %v2274
        %v2291 = vpack.c.b16 %v2275, %v2275
        %v2292 = vpack.c.b16 %v2276, %v2276
        %v2293 = vpack.c.b16 %v2277, %v2277
        %v2294 = vpack.c.b16 %v2278, %v2278
        %v2295 = vpack.c.b16 %v2279, %v2279
        %v2296 = vpack.c.b16 %v2280, %v2280
        %v2297 = vpack.c.b16 %v2281, %v2281
        %v2298 = vpack.c.b16 %v2282, %v2282
        %v2299 = vpack.c.b16 %v2283, %v2283
        %2316 = vst.msk [vmem:[%s309] sm:$0xf] %vm1117, %v2284
        %2317 = vst.msk [vmem:[%s309 + $0x4] sm:$0xf] %vm1117, %v2285
        %2318 = vst.msk [vmem:[%s309 + $0x8] sm:$0xf] %vm1117, %v2286
        %2319 = vst.msk [vmem:[%s309 + $0xc] sm:$0xf] %vm1117, %v2287
        %2320 = vst.msk [vmem:[%s309 + $0x10] sm:$0xf] %vm1117, %v2288
        %2321 = vst.msk [vmem:[%s309 + $0x14] sm:$0xf] %vm1117, %v2289
        %2322 = vst.msk [vmem:[%s309 + $0x18] sm:$0xf] %vm1117, %v2290
        %2323 = vst.msk [vmem:[%s309 + $0x1c] sm:$0xf] %vm1117, %v2291
        %2324 = vst.msk [vmem:[%s309 + $0x20] sm:$0xf] %vm1117, %v2292
        %2325 = vst.msk [vmem:[%s309 + $0x24] sm:$0xf] %vm1117, %v2293
        %2326 = vst.msk [vmem:[%s309 + $0x28] sm:$0xf] %vm1117, %v2294
        %2327 = vst.msk [vmem:[%s309 + $0x2c] sm:$0xf] %vm1117, %v2295
        %2328 = vst.msk [vmem:[%s309 + $0x30] sm:$0xf] %vm1117, %v2296
        %2329 = vst.msk [vmem:[%s309 + $0x34] sm:$0xf] %vm1117, %v2297
        %2330 = vst.msk [vmem:[%s309 + $0x38] sm:$0xf] %vm1117, %v2298
        %2331 = vst.msk [vmem:[%s309 + $0x3c] sm:$0xf] %vm1117, %v2299
        %s2332 = sand.u32 %s153, 1
        %s2333 = sand.u32 %s153, 1
        %s2334 = smul.addr %s2333, 64
        %s2335 = scalar_lea.vmem [#allocation2], %s2334
        %s2336 = sand.u32 %s181, 1
        %s2337 = sand.u32 %s181, 1
        %s2338 = smul.addr %s2337, 64
        %s2339 = scalar_lea.vmem [#allocation3], %s2338
        %s2340 = sand.u32 %s209, 1
        %s2341 = sand.u32 %s209, 1
        %s2342 = smul.addr %s2341, 64
        %s2343 = scalar_lea.vmem [#allocation4], %s2342
        // Predicated region
        $region41: #{tpu_custom_call.1} parent=39 // pred_check
          %p2344 = pneg %p163
        $region42: #{tpu_custom_call.1} parent=39 // pred_check_branch
          %2346 = sbr.rel (%p2344) target = $region44
        $region43: #{tpu_custom_call.1} parent=39 // pred_region
          %s2347 = smul.u32 4, %s24
          %s2348 = smul.addr %s23, 48
          %s2349 = sadd.s32 %s2347, %s2348
          %s2350 = smul.addr %s2349, 4
          %s2351 = scalar_lea.vmem %s5, %s2350
          // Predicated region
          $region45: #{tpu_custom_call.1} parent=43 // pred_check
            _
          $region46: #{tpu_custom_call.1} parent=43 // pred_check_branch
            %2353 = sbr.rel (0) target = $region48
          $region47: #{tpu_custom_call.1} parent=43 // pred_region
            // Predicated region
            $region49: #{tpu_custom_call.1} parent=47 // pred_check
              _
            $region50: #{tpu_custom_call.1} parent=47 // pred_check_branch
              %2355 = sbr.rel target = $region52
            $region51: #{tpu_custom_call.1} parent=47 // pred_region
              // Predicated region
              $region64: #{tpu_custom_call.1} parent=51 // pred_check
                _
              $region65: #{tpu_custom_call.1} parent=51 // pred_check_branch
                %2401 = sbr.rel (0) target = $region67
              $region66: #{tpu_custom_call.1} parent=51 // pred_region
                loop: start=0, step=1, limit=1
                $region68: #{tpu_custom_call.1} parent=66 // loop_pre_header
                  _
                $region69: #{tpu_custom_call.1} parent=66 // loop_header
                  %s2403 = sphi 0, %s2407
                  %p2404 = scmp.ge.s32.totalorder %s2403, 1
                  %s2408 = sphi %s2335, %s2335
                  %s2409 = sphi %s2351, %s2351
                $region70: #{tpu_custom_call.1} parent=66 // loop_header_branch
                  %2406 = sbr.rel (%p2404) target = $region74
                $region71: #{tpu_custom_call.1} parent=66 // loop_body
                  _
                $region72: #{tpu_custom_call.1} parent=66 // loop_footer
                  %s2407 = sadd.s32 1, %s2403
                $region73: #{tpu_custom_call.1} parent=66 // loop_footer_branch
                  %2402 = sbr.rel target = $region69
                $region74: #{tpu_custom_call.1} parent=66 // loop_exit
                  _
                %s2411 = ssub.s32 16, 1
                loop: start=0, step=1, limit=1
                $region75: #{tpu_custom_call.1} parent=66 // loop_pre_header
                  _
                $region76: #{tpu_custom_call.1} parent=66 // loop_header
                  %s2413 = sphi 0, %s2417
                  %p2414 = scmp.ge.s32.totalorder %s2413, 1
                  %s2418 = sphi %s2335, %s2335
                  %s2419 = sphi %s2351, %s2351
                $region77: #{tpu_custom_call.1} parent=66 // loop_header_branch
                  %2416 = sbr.rel (%p2414) target = $region81
                $region78: #{tpu_custom_call.1} parent=66 // loop_body
                  %v2420 = vld [vmem:[%s2418] sm:%s2411]
                  %2421 = vst [vmem:[%s2419] sm:%s2411] %v2420
                  %v2422 = vld [vmem:[%s2418 + $0x4] sm:%s2411]
                  %2423 = vst [vmem:[%s2419 + $0x4] sm:%s2411] %v2422
                  %v2424 = vld [vmem:[%s2418 + $0x8] sm:%s2411]
                  %2425 = vst [vmem:[%s2419 + $0x8] sm:%s2411] %v2424
                  %v2426 = vld [vmem:[%s2418 + $0xc] sm:%s2411]
                  %2427 = vst [vmem:[%s2419 + $0xc] sm:%s2411] %v2426
                  %v2428 = vld [vmem:[%s2418 + $0x10] sm:%s2411]
                  %2429 = vst [vmem:[%s2419 + $0x30] sm:%s2411] %v2428
                  %v2430 = vld [vmem:[%s2418 + $0x14] sm:%s2411]
                  %2431 = vst [vmem:[%s2419 + $0x34] sm:%s2411] %v2430
                  %v2432 = vld [vmem:[%s2418 + $0x18] sm:%s2411]
                  %2433 = vst [vmem:[%s2419 + $0x38] sm:%s2411] %v2432
                  %v2434 = vld [vmem:[%s2418 + $0x1c] sm:%s2411]
                  %2435 = vst [vmem:[%s2419 + $0x3c] sm:%s2411] %v2434
                  %v2436 = vld [vmem:[%s2418 + $0x20] sm:%s2411]
                  %2437 = vst [vmem:[%s2419 + $0x60] sm:%s2411] %v2436
                  %v2438 = vld [vmem:[%s2418 + $0x24] sm:%s2411]
                  %2439 = vst [vmem:[%s2419 + $0x64] sm:%s2411] %v2438
                  %v2440 = vld [vmem:[%s2418 + $0x28] sm:%s2411]
                  %2441 = vst [vmem:[%s2419 + $0x68] sm:%s2411] %v2440
                  %v2442 = vld [vmem:[%s2418 + $0x2c] sm:%s2411]
                  %2443 = vst [vmem:[%s2419 + $0x6c] sm:%s2411] %v2442
                  %v2444 = vld [vmem:[%s2418 + $0x30] sm:%s2411]
                  %2445 = vst [vmem:[%s2419 + $0x90] sm:%s2411] %v2444
                  %v2446 = vld [vmem:[%s2418 + $0x34] sm:%s2411]
                  %2447 = vst [vmem:[%s2419 + $0x94] sm:%s2411] %v2446
                  %v2448 = vld [vmem:[%s2418 + $0x38] sm:%s2411]
                  %2449 = vst [vmem:[%s2419 + $0x98] sm:%s2411] %v2448
                  %v2450 = vld [vmem:[%s2418 + $0x3c] sm:%s2411]
                  %2451 = vst [vmem:[%s2419 + $0x9c] sm:%s2411] %v2450
                $region79: #{tpu_custom_call.1} parent=66 // loop_footer
                  %s2417 = sadd.s32 1, %s2413
                $region80: #{tpu_custom_call.1} parent=66 // loop_footer_branch
                  %2412 = sbr.rel target = $region76
                $region81: #{tpu_custom_call.1} parent=66 // loop_exit
                  _
              $region67: #{tpu_custom_call.1} parent=51 // pred_fallthru
                _
            $region52: #{tpu_custom_call.1} parent=47 // pred_fallthru
              _
            // Predicated region
            $region53: #{tpu_custom_call.1} parent=47 // pred_check
              _
            $region54: #{tpu_custom_call.1} parent=47 // pred_check_branch
              %2357 = sbr.rel (0) target = $region56
            $region55: #{tpu_custom_call.1} parent=47 // pred_region
              %s2359 = ssub.s32 16, 1
              loop: start=0, step=1, limit=1
              $region57: #{tpu_custom_call.1} parent=55 // loop_pre_header
                _
              $region58: #{tpu_custom_call.1} parent=55 // loop_header
                %s2361 = sphi 0, %s2365
                %p2362 = scmp.ge.s32.totalorder %s2361, 1
                %s2366 = sphi %s2335, %s2335
                %s2367 = sphi %s2351, %s2351
              $region59: #{tpu_custom_call.1} parent=55 // loop_header_branch
                %2364 = sbr.rel (%p2362) target = $region63
              $region60: #{tpu_custom_call.1} parent=55 // loop_body
                %v2368 = vld [vmem:[%s2366] sm:%s2359]
                %2369 = vst [vmem:[%s2367] sm:%s2359] %v2368
                %v2370 = vld [vmem:[%s2366 + $0x4] sm:%s2359]
                %2371 = vst [vmem:[%s2367 + $0x4] sm:%s2359] %v2370
                %v2372 = vld [vmem:[%s2366 + $0x8] sm:%s2359]
                %2373 = vst [vmem:[%s2367 + $0x8] sm:%s2359] %v2372
                %v2374 = vld [vmem:[%s2366 + $0xc] sm:%s2359]
                %2375 = vst [vmem:[%s2367 + $0xc] sm:%s2359] %v2374
                %v2376 = vld [vmem:[%s2366 + $0x10] sm:%s2359]
                %2377 = vst [vmem:[%s2367 + $0x30] sm:%s2359] %v2376
                %v2378 = vld [vmem:[%s2366 + $0x14] sm:%s2359]
                %2379 = vst [vmem:[%s2367 + $0x34] sm:%s2359] %v2378
                %v2380 = vld [vmem:[%s2366 + $0x18] sm:%s2359]
                %2381 = vst [vmem:[%s2367 + $0x38] sm:%s2359] %v2380
                %v2382 = vld [vmem:[%s2366 + $0x1c] sm:%s2359]
                %2383 = vst [vmem:[%s2367 + $0x3c] sm:%s2359] %v2382
                %v2384 = vld [vmem:[%s2366 + $0x20] sm:%s2359]
                %2385 = vst [vmem:[%s2367 + $0x60] sm:%s2359] %v2384
                %v2386 = vld [vmem:[%s2366 + $0x24] sm:%s2359]
                %2387 = vst [vmem:[%s2367 + $0x64] sm:%s2359] %v2386
                %v2388 = vld [vmem:[%s2366 + $0x28] sm:%s2359]
                %2389 = vst [vmem:[%s2367 + $0x68] sm:%s2359] %v2388
                %v2390 = vld [vmem:[%s2366 + $0x2c] sm:%s2359]
                %2391 = vst [vmem:[%s2367 + $0x6c] sm:%s2359] %v2390
                %v2392 = vld [vmem:[%s2366 + $0x30] sm:%s2359]
                %2393 = vst [vmem:[%s2367 + $0x90] sm:%s2359] %v2392
                %v2394 = vld [vmem:[%s2366 + $0x34] sm:%s2359]
                %2395 = vst [vmem:[%s2367 + $0x94] sm:%s2359] %v2394
                %v2396 = vld [vmem:[%s2366 + $0x38] sm:%s2359]
                %2397 = vst [vmem:[%s2367 + $0x98] sm:%s2359] %v2396
                %v2398 = vld [vmem:[%s2366 + $0x3c] sm:%s2359]
                %2399 = vst [vmem:[%s2367 + $0x9c] sm:%s2359] %v2398
              $region61: #{tpu_custom_call.1} parent=55 // loop_footer
                %s2365 = sadd.s32 1, %s2361
              $region62: #{tpu_custom_call.1} parent=55 // loop_footer_branch
                %2360 = sbr.rel target = $region58
              $region63: #{tpu_custom_call.1} parent=55 // loop_exit
                _
            $region56: #{tpu_custom_call.1} parent=47 // pred_fallthru
              _
          $region48: #{tpu_custom_call.1} parent=43 // pred_fallthru
            _
          %2452 = vnop
        $region44: #{tpu_custom_call.1} parent=39 // pred_fallthru
          _
        // Predicated region
        $region82: #{tpu_custom_call.1} parent=39 // pred_check
          %p2453 = pneg %p191
        $region83: #{tpu_custom_call.1} parent=39 // pred_check_branch
          %2455 = sbr.rel (%p2453) target = $region85
        $region84: #{tpu_custom_call.1} parent=39 // pred_region
          %s2456 = smul.u32 4, %s24
          %s2457 = smul.addr %s23, 48
          %s2458 = sadd.s32 %s2456, %s2457
          %s2459 = smul.addr %s2458, 4
          %s2460 = scalar_lea.vmem %s6, %s2459
          // Predicated region
          $region86: #{tpu_custom_call.1} parent=84 // pred_check
            _
          $region87: #{tpu_custom_call.1} parent=84 // pred_check_branch
            %2462 = sbr.rel (0) target = $region89
          $region88: #{tpu_custom_call.1} parent=84 // pred_region
            // Predicated region
            $region90: #{tpu_custom_call.1} parent=88 // pred_check
              _
            $region91: #{tpu_custom_call.1} parent=88 // pred_check_branch
              %2464 = sbr.rel target = $region93
            $region92: #{tpu_custom_call.1} parent=88 // pred_region
              // Predicated region
              $region105: #{tpu_custom_call.1} parent=92 // pred_check
                _
              $region106: #{tpu_custom_call.1} parent=92 // pred_check_branch
                %2510 = sbr.rel (0) target = $region108
              $region107: #{tpu_custom_call.1} parent=92 // pred_region
                loop: start=0, step=1, limit=1
                $region109: #{tpu_custom_call.1} parent=107 // loop_pre_header
                  _
                $region110: #{tpu_custom_call.1} parent=107 // loop_header
                  %s2512 = sphi 0, %s2516
                  %p2513 = scmp.ge.s32.totalorder %s2512, 1
                  %s2517 = sphi %s2339, %s2339
                  %s2518 = sphi %s2460, %s2460
                $region111: #{tpu_custom_call.1} parent=107 // loop_header_branch
                  %2515 = sbr.rel (%p2513) target = $region115
                $region112: #{tpu_custom_call.1} parent=107 // loop_body
                  _
                $region113: #{tpu_custom_call.1} parent=107 // loop_footer
                  %s2516 = sadd.s32 1, %s2512
                $region114: #{tpu_custom_call.1} parent=107 // loop_footer_branch
                  %2511 = sbr.rel target = $region110
                $region115: #{tpu_custom_call.1} parent=107 // loop_exit
                  _
                %s2520 = ssub.s32 16, 1
                loop: start=0, step=1, limit=1
                $region116: #{tpu_custom_call.1} parent=107 // loop_pre_header
                  _
                $region117: #{tpu_custom_call.1} parent=107 // loop_header
                  %s2522 = sphi 0, %s2526
                  %p2523 = scmp.ge.s32.totalorder %s2522, 1
                  %s2527 = sphi %s2339, %s2339
                  %s2528 = sphi %s2460, %s2460
                $region118: #{tpu_custom_call.1} parent=107 // loop_header_branch
                  %2525 = sbr.rel (%p2523) target = $region122
                $region119: #{tpu_custom_call.1} parent=107 // loop_body
                  %v2529 = vld [vmem:[%s2527] sm:%s2520]
                  %2530 = vst [vmem:[%s2528] sm:%s2520] %v2529
                  %v2531 = vld [vmem:[%s2527 + $0x4] sm:%s2520]
                  %2532 = vst [vmem:[%s2528 + $0x4] sm:%s2520] %v2531
                  %v2533 = vld [vmem:[%s2527 + $0x8] sm:%s2520]
                  %2534 = vst [vmem:[%s2528 + $0x8] sm:%s2520] %v2533
                  %v2535 = vld [vmem:[%s2527 + $0xc] sm:%s2520]
                  %2536 = vst [vmem:[%s2528 + $0xc] sm:%s2520] %v2535
                  %v2537 = vld [vmem:[%s2527 + $0x10] sm:%s2520]
                  %2538 = vst [vmem:[%s2528 + $0x30] sm:%s2520] %v2537
                  %v2539 = vld [vmem:[%s2527 + $0x14] sm:%s2520]
                  %2540 = vst [vmem:[%s2528 + $0x34] sm:%s2520] %v2539
                  %v2541 = vld [vmem:[%s2527 + $0x18] sm:%s2520]
                  %2542 = vst [vmem:[%s2528 + $0x38] sm:%s2520] %v2541
                  %v2543 = vld [vmem:[%s2527 + $0x1c] sm:%s2520]
                  %2544 = vst [vmem:[%s2528 + $0x3c] sm:%s2520] %v2543
                  %v2545 = vld [vmem:[%s2527 + $0x20] sm:%s2520]
                  %2546 = vst [vmem:[%s2528 + $0x60] sm:%s2520] %v2545
                  %v2547 = vld [vmem:[%s2527 + $0x24] sm:%s2520]
                  %2548 = vst [vmem:[%s2528 + $0x64] sm:%s2520] %v2547
                  %v2549 = vld [vmem:[%s2527 + $0x28] sm:%s2520]
                  %2550 = vst [vmem:[%s2528 + $0x68] sm:%s2520] %v2549
                  %v2551 = vld [vmem:[%s2527 + $0x2c] sm:%s2520]
                  %2552 = vst [vmem:[%s2528 + $0x6c] sm:%s2520] %v2551
                  %v2553 = vld [vmem:[%s2527 + $0x30] sm:%s2520]
                  %2554 = vst [vmem:[%s2528 + $0x90] sm:%s2520] %v2553
                  %v2555 = vld [vmem:[%s2527 + $0x34] sm:%s2520]
                  %2556 = vst [vmem:[%s2528 + $0x94] sm:%s2520] %v2555
                  %v2557 = vld [vmem:[%s2527 + $0x38] sm:%s2520]
                  %2558 = vst [vmem:[%s2528 + $0x98] sm:%s2520] %v2557
                  %v2559 = vld [vmem:[%s2527 + $0x3c] sm:%s2520]
                  %2560 = vst [vmem:[%s2528 + $0x9c] sm:%s2520] %v2559
                $region120: #{tpu_custom_call.1} parent=107 // loop_footer
                  %s2526 = sadd.s32 1, %s2522
                $region121: #{tpu_custom_call.1} parent=107 // loop_footer_branch
                  %2521 = sbr.rel target = $region117
                $region122: #{tpu_custom_call.1} parent=107 // loop_exit
                  _
              $region108: #{tpu_custom_call.1} parent=92 // pred_fallthru
                _
            $region93: #{tpu_custom_call.1} parent=88 // pred_fallthru
              _
            // Predicated region
            $region94: #{tpu_custom_call.1} parent=88 // pred_check
              _
            $region95: #{tpu_custom_call.1} parent=88 // pred_check_branch
              %2466 = sbr.rel (0) target = $region97
            $region96: #{tpu_custom_call.1} parent=88 // pred_region
              %s2468 = ssub.s32 16, 1
              loop: start=0, step=1, limit=1
              $region98: #{tpu_custom_call.1} parent=96 // loop_pre_header
                _
              $region99: #{tpu_custom_call.1} parent=96 // loop_header
                %s2470 = sphi 0, %s2474
                %p2471 = scmp.ge.s32.totalorder %s2470, 1
                %s2475 = sphi %s2339, %s2339
                %s2476 = sphi %s2460, %s2460
              $region100: #{tpu_custom_call.1} parent=96 // loop_header_branch
                %2473 = sbr.rel (%p2471) target = $region104
              $region101: #{tpu_custom_call.1} parent=96 // loop_body
                %v2477 = vld [vmem:[%s2475] sm:%s2468]
                %2478 = vst [vmem:[%s2476] sm:%s2468] %v2477
                %v2479 = vld [vmem:[%s2475 + $0x4] sm:%s2468]
                %2480 = vst [vmem:[%s2476 + $0x4] sm:%s2468] %v2479
                %v2481 = vld [vmem:[%s2475 + $0x8] sm:%s2468]
                %2482 = vst [vmem:[%s2476 + $0x8] sm:%s2468] %v2481
                %v2483 = vld [vmem:[%s2475 + $0xc] sm:%s2468]
                %2484 = vst [vmem:[%s2476 + $0xc] sm:%s2468] %v2483
                %v2485 = vld [vmem:[%s2475 + $0x10] sm:%s2468]
                %2486 = vst [vmem:[%s2476 + $0x30] sm:%s2468] %v2485
                %v2487 = vld [vmem:[%s2475 + $0x14] sm:%s2468]
                %2488 = vst [vmem:[%s2476 + $0x34] sm:%s2468] %v2487
                %v2489 = vld [vmem:[%s2475 + $0x18] sm:%s2468]
                %2490 = vst [vmem:[%s2476 + $0x38] sm:%s2468] %v2489
                %v2491 = vld [vmem:[%s2475 + $0x1c] sm:%s2468]
                %2492 = vst [vmem:[%s2476 + $0x3c] sm:%s2468] %v2491
                %v2493 = vld [vmem:[%s2475 + $0x20] sm:%s2468]
                %2494 = vst [vmem:[%s2476 + $0x60] sm:%s2468] %v2493
                %v2495 = vld [vmem:[%s2475 + $0x24] sm:%s2468]
                %2496 = vst [vmem:[%s2476 + $0x64] sm:%s2468] %v2495
                %v2497 = vld [vmem:[%s2475 + $0x28] sm:%s2468]
                %2498 = vst [vmem:[%s2476 + $0x68] sm:%s2468] %v2497
                %v2499 = vld [vmem:[%s2475 + $0x2c] sm:%s2468]
                %2500 = vst [vmem:[%s2476 + $0x6c] sm:%s2468] %v2499
                %v2501 = vld [vmem:[%s2475 + $0x30] sm:%s2468]
                %2502 = vst [vmem:[%s2476 + $0x90] sm:%s2468] %v2501
                %v2503 = vld [vmem:[%s2475 + $0x34] sm:%s2468]
                %2504 = vst [vmem:[%s2476 + $0x94] sm:%s2468] %v2503
                %v2505 = vld [vmem:[%s2475 + $0x38] sm:%s2468]
                %2506 = vst [vmem:[%s2476 + $0x98] sm:%s2468] %v2505
                %v2507 = vld [vmem:[%s2475 + $0x3c] sm:%s2468]
                %2508 = vst [vmem:[%s2476 + $0x9c] sm:%s2468] %v2507
              $region102: #{tpu_custom_call.1} parent=96 // loop_footer
                %s2474 = sadd.s32 1, %s2470
              $region103: #{tpu_custom_call.1} parent=96 // loop_footer_branch
                %2469 = sbr.rel target = $region99
              $region104: #{tpu_custom_call.1} parent=96 // loop_exit
                _
            $region97: #{tpu_custom_call.1} parent=88 // pred_fallthru
              _
          $region89: #{tpu_custom_call.1} parent=84 // pred_fallthru
            _
          %2561 = vnop
        $region85: #{tpu_custom_call.1} parent=39 // pred_fallthru
          _
        // Predicated region
        $region123: #{tpu_custom_call.1} parent=39 // pred_check
          %p2562 = pneg %p219
        $region124: #{tpu_custom_call.1} parent=39 // pred_check_branch
          %2564 = sbr.rel (%p2562) target = $region126
        $region125: #{tpu_custom_call.1} parent=39 // pred_region
          %s2565 = smul.u32 4, %s24
          %s2566 = smul.addr %s23, 48
          %s2567 = sadd.s32 %s2565, %s2566
          %s2568 = smul.addr %s2567, 4
          %s2569 = scalar_lea.vmem %s7, %s2568
          // Predicated region
          $region127: #{tpu_custom_call.1} parent=125 // pred_check
            _
          $region128: #{tpu_custom_call.1} parent=125 // pred_check_branch
            %2571 = sbr.rel (0) target = $region130
          $region129: #{tpu_custom_call.1} parent=125 // pred_region
            // Predicated region
            $region131: #{tpu_custom_call.1} parent=129 // pred_check
              _
            $region132: #{tpu_custom_call.1} parent=129 // pred_check_branch
              %2573 = sbr.rel target = $region134
            $region133: #{tpu_custom_call.1} parent=129 // pred_region
              // Predicated region
              $region146: #{tpu_custom_call.1} parent=133 // pred_check
                _
              $region147: #{tpu_custom_call.1} parent=133 // pred_check_branch
                %2619 = sbr.rel (0) target = $region149
              $region148: #{tpu_custom_call.1} parent=133 // pred_region
                loop: start=0, step=1, limit=1
                $region150: #{tpu_custom_call.1} parent=148 // loop_pre_header
                  _
                $region151: #{tpu_custom_call.1} parent=148 // loop_header
                  %s2621 = sphi 0, %s2625
                  %p2622 = scmp.ge.s32.totalorder %s2621, 1
                  %s2626 = sphi %s2343, %s2343
                  %s2627 = sphi %s2569, %s2569
                $region152: #{tpu_custom_call.1} parent=148 // loop_header_branch
                  %2624 = sbr.rel (%p2622) target = $region156
                $region153: #{tpu_custom_call.1} parent=148 // loop_body
                  _
                $region154: #{tpu_custom_call.1} parent=148 // loop_footer
                  %s2625 = sadd.s32 1, %s2621
                $region155: #{tpu_custom_call.1} parent=148 // loop_footer_branch
                  %2620 = sbr.rel target = $region151
                $region156: #{tpu_custom_call.1} parent=148 // loop_exit
                  _
                %s2629 = ssub.s32 16, 1
                loop: start=0, step=1, limit=1
                $region157: #{tpu_custom_call.1} parent=148 // loop_pre_header
                  _
                $region158: #{tpu_custom_call.1} parent=148 // loop_header
                  %s2631 = sphi 0, %s2635
                  %p2632 = scmp.ge.s32.totalorder %s2631, 1
                  %s2636 = sphi %s2343, %s2343
                  %s2637 = sphi %s2569, %s2569
                $region159: #{tpu_custom_call.1} parent=148 // loop_header_branch
                  %2634 = sbr.rel (%p2632) target = $region163
                $region160: #{tpu_custom_call.1} parent=148 // loop_body
                  %v2638 = vld [vmem:[%s2636] sm:%s2629]
                  %2639 = vst [vmem:[%s2637] sm:%s2629] %v2638
                  %v2640 = vld [vmem:[%s2636 + $0x4] sm:%s2629]
                  %2641 = vst [vmem:[%s2637 + $0x4] sm:%s2629] %v2640
                  %v2642 = vld [vmem:[%s2636 + $0x8] sm:%s2629]
                  %2643 = vst [vmem:[%s2637 + $0x8] sm:%s2629] %v2642
                  %v2644 = vld [vmem:[%s2636 + $0xc] sm:%s2629]
                  %2645 = vst [vmem:[%s2637 + $0xc] sm:%s2629] %v2644
                  %v2646 = vld [vmem:[%s2636 + $0x10] sm:%s2629]
                  %2647 = vst [vmem:[%s2637 + $0x30] sm:%s2629] %v2646
                  %v2648 = vld [vmem:[%s2636 + $0x14] sm:%s2629]
                  %2649 = vst [vmem:[%s2637 + $0x34] sm:%s2629] %v2648
                  %v2650 = vld [vmem:[%s2636 + $0x18] sm:%s2629]
                  %2651 = vst [vmem:[%s2637 + $0x38] sm:%s2629] %v2650
                  %v2652 = vld [vmem:[%s2636 + $0x1c] sm:%s2629]
                  %2653 = vst [vmem:[%s2637 + $0x3c] sm:%s2629] %v2652
                  %v2654 = vld [vmem:[%s2636 + $0x20] sm:%s2629]
                  %2655 = vst [vmem:[%s2637 + $0x60] sm:%s2629] %v2654
                  %v2656 = vld [vmem:[%s2636 + $0x24] sm:%s2629]
                  %2657 = vst [vmem:[%s2637 + $0x64] sm:%s2629] %v2656
                  %v2658 = vld [vmem:[%s2636 + $0x28] sm:%s2629]
                  %2659 = vst [vmem:[%s2637 + $0x68] sm:%s2629] %v2658
                  %v2660 = vld [vmem:[%s2636 + $0x2c] sm:%s2629]
                  %2661 = vst [vmem:[%s2637 + $0x6c] sm:%s2629] %v2660
                  %v2662 = vld [vmem:[%s2636 + $0x30] sm:%s2629]
                  %2663 = vst [vmem:[%s2637 + $0x90] sm:%s2629] %v2662
                  %v2664 = vld [vmem:[%s2636 + $0x34] sm:%s2629]
                  %2665 = vst [vmem:[%s2637 + $0x94] sm:%s2629] %v2664
                  %v2666 = vld [vmem:[%s2636 + $0x38] sm:%s2629]
                  %2667 = vst [vmem:[%s2637 + $0x98] sm:%s2629] %v2666
                  %v2668 = vld [vmem:[%s2636 + $0x3c] sm:%s2629]
                  %2669 = vst [vmem:[%s2637 + $0x9c] sm:%s2629] %v2668
                $region161: #{tpu_custom_call.1} parent=148 // loop_footer
                  %s2635 = sadd.s32 1, %s2631
                $region162: #{tpu_custom_call.1} parent=148 // loop_footer_branch
                  %2630 = sbr.rel target = $region158
                $region163: #{tpu_custom_call.1} parent=148 // loop_exit
                  _
              $region149: #{tpu_custom_call.1} parent=133 // pred_fallthru
                _
            $region134: #{tpu_custom_call.1} parent=129 // pred_fallthru
              _
            // Predicated region
            $region135: #{tpu_custom_call.1} parent=129 // pred_check
              _
            $region136: #{tpu_custom_call.1} parent=129 // pred_check_branch
              %2575 = sbr.rel (0) target = $region138
            $region137: #{tpu_custom_call.1} parent=129 // pred_region
              %s2577 = ssub.s32 16, 1
              loop: start=0, step=1, limit=1
              $region139: #{tpu_custom_call.1} parent=137 // loop_pre_header
                _
              $region140: #{tpu_custom_call.1} parent=137 // loop_header
                %s2579 = sphi 0, %s2583
                %p2580 = scmp.ge.s32.totalorder %s2579, 1
                %s2584 = sphi %s2343, %s2343
                %s2585 = sphi %s2569, %s2569
              $region141: #{tpu_custom_call.1} parent=137 // loop_header_branch
                %2582 = sbr.rel (%p2580) target = $region145
              $region142: #{tpu_custom_call.1} parent=137 // loop_body
                %v2586 = vld [vmem:[%s2584] sm:%s2577]
                %2587 = vst [vmem:[%s2585] sm:%s2577] %v2586
                %v2588 = vld [vmem:[%s2584 + $0x4] sm:%s2577]
                %2589 = vst [vmem:[%s2585 + $0x4] sm:%s2577] %v2588
                %v2590 = vld [vmem:[%s2584 + $0x8] sm:%s2577]
                %2591 = vst [vmem:[%s2585 + $0x8] sm:%s2577] %v2590
                %v2592 = vld [vmem:[%s2584 + $0xc] sm:%s2577]
                %2593 = vst [vmem:[%s2585 + $0xc] sm:%s2577] %v2592
                %v2594 = vld [vmem:[%s2584 + $0x10] sm:%s2577]
                %2595 = vst [vmem:[%s2585 + $0x30] sm:%s2577] %v2594
                %v2596 = vld [vmem:[%s2584 + $0x14] sm:%s2577]
                %2597 = vst [vmem:[%s2585 + $0x34] sm:%s2577] %v2596
                %v2598 = vld [vmem:[%s2584 + $0x18] sm:%s2577]
                %2599 = vst [vmem:[%s2585 + $0x38] sm:%s2577] %v2598
                %v2600 = vld [vmem:[%s2584 + $0x1c] sm:%s2577]
                %2601 = vst [vmem:[%s2585 + $0x3c] sm:%s2577] %v2600
                %v2602 = vld [vmem:[%s2584 + $0x20] sm:%s2577]
                %2603 = vst [vmem:[%s2585 + $0x60] sm:%s2577] %v2602
                %v2604 = vld [vmem:[%s2584 + $0x24] sm:%s2577]
                %2605 = vst [vmem:[%s2585 + $0x64] sm:%s2577] %v2604
                %v2606 = vld [vmem:[%s2584 + $0x28] sm:%s2577]
                %2607 = vst [vmem:[%s2585 + $0x68] sm:%s2577] %v2606
                %v2608 = vld [vmem:[%s2584 + $0x2c] sm:%s2577]
                %2609 = vst [vmem:[%s2585 + $0x6c] sm:%s2577] %v2608
                %v2610 = vld [vmem:[%s2584 + $0x30] sm:%s2577]
                %2611 = vst [vmem:[%s2585 + $0x90] sm:%s2577] %v2610
                %v2612 = vld [vmem:[%s2584 + $0x34] sm:%s2577]
                %2613 = vst [vmem:[%s2585 + $0x94] sm:%s2577] %v2612
                %v2614 = vld [vmem:[%s2584 + $0x38] sm:%s2577]
                %2615 = vst [vmem:[%s2585 + $0x98] sm:%s2577] %v2614
                %v2616 = vld [vmem:[%s2584 + $0x3c] sm:%s2577]
                %2617 = vst [vmem:[%s2585 + $0x9c] sm:%s2577] %v2616
              $region143: #{tpu_custom_call.1} parent=137 // loop_footer
                %s2583 = sadd.s32 1, %s2579
              $region144: #{tpu_custom_call.1} parent=137 // loop_footer_branch
                %2578 = sbr.rel target = $region140
              $region145: #{tpu_custom_call.1} parent=137 // loop_exit
                _
            $region138: #{tpu_custom_call.1} parent=129 // pred_fallthru
              _
          $region130: #{tpu_custom_call.1} parent=125 // pred_fallthru
            _
          %2670 = vnop
        $region126: #{tpu_custom_call.1} parent=39 // pred_fallthru
          _
      $region40: #{tpu_custom_call.1} parent=5 // pred_fallthru
        _
      %p2671 = scmp.le.s32.totalorder 2, %s14
      // Predicated region
      $region164: #{tpu_custom_call.1} parent=5 // pred_check
        %p2672 = pneg %p2671
      $region165: #{tpu_custom_call.1} parent=5 // pred_check_branch
        %2674 = sbr.rel (%p2672) target = $region167
      $region166: #{tpu_custom_call.1} parent=5 // pred_region
        %s2675 = ssub.s32 %s14, 2
        // Predicated region
        $region168: #{tpu_custom_call.1} parent=166 // pred_check
          %p2676 = pneg %p169
        $region169: #{tpu_custom_call.1} parent=166 // pred_check_branch
          %2678 = sbr.rel (%p2676) target = $region171
        $region170: #{tpu_custom_call.1} parent=166 // pred_region
          %s2679 = sand.u32 %s154, 1
          %s2680 = sand.u32 %s154, 1
          %s2681 = smul.addr %s2680, 64
          %s2682 = scalar_lea.vmem [#allocation2], %s2681
        $region171: #{tpu_custom_call.1} parent=166 // pred_fallthru
          _
        // Predicated region
        $region172: #{tpu_custom_call.1} parent=166 // pred_check
          %p2683 = pneg %p197
        $region173: #{tpu_custom_call.1} parent=166 // pred_check_branch
          %2685 = sbr.rel (%p2683) target = $region175
        $region174: #{tpu_custom_call.1} parent=166 // pred_region
          %s2686 = sand.u32 %s182, 1
          %s2687 = sand.u32 %s182, 1
          %s2688 = smul.addr %s2687, 64
          %s2689 = scalar_lea.vmem [#allocation3], %s2688
        $region175: #{tpu_custom_call.1} parent=166 // pred_fallthru
          _
        // Predicated region
        $region176: #{tpu_custom_call.1} parent=166 // pred_check
          %p2690 = pneg %p225
        $region177: #{tpu_custom_call.1} parent=166 // pred_check_branch
          %2692 = sbr.rel (%p2690) target = $region179
        $region178: #{tpu_custom_call.1} parent=166 // pred_region
          %s2693 = sand.u32 %s210, 1
          %s2694 = sand.u32 %s210, 1
          %s2695 = smul.addr %s2694, 64
          %s2696 = scalar_lea.vmem [#allocation4], %s2695
        $region179: #{tpu_custom_call.1} parent=166 // pred_fallthru
          _
      $region167: #{tpu_custom_call.1} parent=5 // pred_fallthru
        _
    $region6: #{tpu_custom_call.1} parent=1 // loop_footer
      %s18 = sadd.s32 1, %s14
    $region7: #{tpu_custom_call.1} parent=1 // loop_footer_branch
      %13 = sbr.rel target = $region3
    $region8: #{tpu_custom_call.1} parent=1 // loop_exit
      _

</llo_original>
